<compile_context>
chip_gen: v7x
topology: tpu7x:2x2x1
jax: 0.10.0
libtpu: 0.0.40
codegen_flags: <defaults>
</compile_context>

<pallas_src>
import jax
import jax.numpy as jnp
from jax.experimental import pallas as pl
from jax.experimental.pallas import tpu as pltpu


def _round_up(a, m):
    return (a + m - 1) // m * m


def _cdiv(a, b):
    return -(-a // b)


def _default_min_grid_steps():
    """>=8 total grid steps on 2-TC chips (v7x megacore), 2 on single-TC chips."""
    try:
        kind = jax.devices()[0].device_kind.lower()
    except Exception:
        return 8
    single_tc = any(t in kind for t in ("v5 lite", "v5e", "v6 lite", "v6e", "v4 lite"))
    return 2 if single_tc else 8


# ----------------------------------------------------------------------------
# Kernel 1: text encoder + full weight folding (grid=(1,), all-tiny matrices)
#
#   x_feat  = [bb_W | bb_b] @ [pooled_mean ; 1]                     (K, 512)
#   h       = LeakyReLU(x_feat @ W1[:512] + emb @ W1[512:] + b1)    (K, 256)
#   weight  = h @ W2 + b2                                            (K, K)
#   M.T     = Ws_top.T @ G.T @ weight + Ws_bot.T                     (K, K)
#   [W_eff | b_col] = M.T @ [bb_W | bb_b] + [0 | seg_b]              (K, Cin+1)
# ----------------------------------------------------------------------------
def _te_fold_kernel(pooled_ref, emb_ref, w1_ref, b1_ref, w2_ref, b2_ref,
                    gt_ref, wstop_t_ref, wsbot_t_ref, bbwaug_ref, segbaug_ref,
                    waug_ref):
    demb = emb_ref.shape[1]           # 512

    # pooled features projected through the (substitute) backbone conv
    x_feat = jnp.dot(bbwaug_ref[...], pooled_ref[...],
                     preferred_element_type=jnp.float32)                # (K, 512)

    # text encoder: Linear(1024, 256) split in two halves (avoids in-kernel concat)
    h = (jnp.dot(x_feat, w1_ref[:demb, :], preferred_element_type=jnp.float32)
         + jnp.dot(emb_ref[...], w1_ref[demb:, :], preferred_element_type=jnp.float32)
         + b1_ref[...])
    h = jnp.where(h > 0, h, 0.01 * h)                                   # LeakyReLU(0.01)
    # TODO(synk): nn.Dropout(0.2) omitted — eval-mode forward (identity).
    weight = (jnp.dot(h, w2_ref[...], preferred_element_type=jnp.float32)
              + b2_ref[...])                                            # (K, K)

    # M.T = Ws_top.T @ G.T @ weight + Ws_bot.T
    mt = (jnp.dot(wstop_t_ref[...],
                  jnp.dot(gt_ref[...], weight, preferred_element_type=jnp.float32),
                  preferred_element_type=jnp.float32)
          + wsbot_t_ref[...])                                           # (K, K)

    # single augmented output [W_eff | b_col] — one store, split in the wrapper
    waug_ref[...] = (jnp.dot(mt, bbwaug_ref[...], preferred_element_type=jnp.float32)
                     + segbaug_ref[...]).astype(waug_ref.dtype)         # (K, Cin+1)


def _full_spec(shape):
    zeros = (0,) * len(shape)
    return pl.BlockSpec(shape, lambda i, _z=zeros: _z)


def text_encoder_fold(pooled_aug, emb, w1_t, b1, w2_t, b2,
                      g_t, ws_top_t, ws_bot_t, bb_w_aug, seg_b_aug):
    k = emb.shape[0]
    cin1 = bb_w_aug.shape[1]
    return pl.pallas_call(
        _te_fold_kernel,
        out_shape=jax.ShapeDtypeStruct((k, cin1), emb.dtype),        # [W_eff | b_col]
        grid=(1,),
        in_specs=[_full_spec(pooled_aug.shape), _full_spec(emb.shape),
                  _full_spec(w1_t.shape), _full_spec(b1.shape),
                  _full_spec(w2_t.shape), _full_spec(b2.shape),
                  _full_spec(g_t.shape), _full_spec(ws_top_t.shape),
                  _full_spec(ws_bot_t.shape), _full_spec(bb_w_aug.shape),
                  _full_spec(seg_b_aug.shape)],
        out_specs=_full_spec((k, cin1)),
        compiler_params=pltpu.CompilerParams(vmem_limit_bytes=32 * 1024 * 1024),
    )(pooled_aug, emb, w1_t, b1, w2_t, b2, g_t, ws_top_t, ws_bot_t,
      bb_w_aug, seg_b_aug)


# ----------------------------------------------------------------------------
# Kernel 2: fused per-voxel head, voxels on the lane axis (lane-dense output)
#   out[K, ts] = W_eff[K, Cin] @ x[Cin, ts] + b_col[K, 1]
# ----------------------------------------------------------------------------
def _head_kernel(x_ref, w_ref, b_ref, o_ref):
    o_ref[...] = (
        jnp.dot(w_ref[...], x_ref[...], preferred_element_type=jnp.float32)
        + b_ref[...]
    ).astype(o_ref.dtype)


def pcnet_head(x_bcs, w_eff, b_col, *, ts=None, ts_max=65536, min_grid_steps=None,
               out_dtype=None, vmem_budget_bytes=24 * 1024 * 1024):
    """x_bcs: (B, Cin, S) native NCDHW-flattened input, w_eff: (K, Cin), b_col: (K, 1).

    No padding / output slicing: Pallas masks the partial edge block, which is safe
    because every output column depends only on its own input column.
    """
    bsz, cin, s = x_bcs.shape
    k = w_eff.shape[0]
    out_dtype = x_bcs.dtype if out_dtype is None else out_dtype

    if min_grid_steps is None:
        min_grid_steps = _default_min_grid_steps()

    if ts is None:
        # Largest lane tile that (a) fits double-buffered in VMEM, (b) keeps at
        # least min_grid_steps total grid steps so v7x's two TensorCores stay fed.
        bytes_in = jnp.dtype(x_bcs.dtype).itemsize
        bytes_out = jnp.dtype(out_dtype).itemsize
        per_col = 2 * (cin * bytes_in + k * bytes_out)       # double-buffered tiles
        ts_vmem_cap = max(128, (vmem_budget_bytes // per_col) // 128 * 128)
        ts_cap = max(128, min((ts_max // 128) * 128, ts_vmem_cap))
        steps_per_batch = max(1, _cdiv(min_grid_steps, bsz))
        ts = min(_round_up(_cdiv(s, steps_per_batch), 128), ts_cap)
    else:
        ts = max(128, _round_up(ts, 128))

    grid = (bsz, _cdiv(s, ts))

    return pl.pallas_call(
        _head_kernel,
        out_shape=jax.ShapeDtypeStruct((bsz, k, s), out_dtype),
        grid=grid,
        in_specs=[
            pl.BlockSpec((None, cin, ts), lambda bi, si: (bi, 0, si)),
            pl.BlockSpec((k, cin), lambda bi, si: (0, 0)),
            pl.BlockSpec((k, 1), lambda bi, si: (0, 0)),
        ],
        out_specs=pl.BlockSpec((None, k, ts), lambda bi, si: (bi, 0, si)),
        compiler_params=pltpu.CompilerParams(
            dimension_semantics=("parallel", "parallel"),
            vmem_limit_bytes=32 * 1024 * 1024),
    )(x_bcs, w_eff, b_col)


# ----------------------------------------------------------------------------
# PCNet forward (Pallas) and pure-JAX reference
# ----------------------------------------------------------------------------
def _pooled_mean_512(x):
    """AdaptiveAvgPool3d((8,8,8)) + batch mean as ONE fused reduction -> (C, 512)."""
    b, c, d, h, w = x.shape
    assert d % 8 == 0 and h % 8 == 0 and w % 8 == 0
    xr = x.reshape(b, c, 8, d // 8, 8, h // 8, 8, w // 8)
    return xr.mean(axis=(0, 3, 5, 7)).reshape(c, 512)


def _adaptive_avg_pool_to_8(x):
    # reference-path pooling, keeps the batch dim (matches AdaptiveAvgPool3d((8,8,8)))
    b, c, d, h, w = x.shape
    assert d % 8 == 0 and h % 8 == 0 and w % 8 == 0
    x = x.reshape(b, c, 8, d // 8, 8, h // 8, 8, w // 8)
    return x.mean(axis=(3, 5, 7))


def pcnet_forward(x, p, ts_max=65536, out_dtype=None):
    b, cin, d, h, w = x.shape
    k = p["organ_embedding"].shape[0]
    s = d * h * w

    # --- pooled features (single fused JAX reduction).  Pooling commutes with the
    #     1x1x1 conv, so we pool raw x (Cin channels) and never materialize the
    #     K-channel x_in in HBM; x is read from HBM exactly once for this branch.
    pooled_mean = _pooled_mean_512(x)                           # (Cin, 512)
    pooled_aug = jnp.concatenate(
        [pooled_mean, jnp.ones((1, pooled_mean.shape[1]), pooled_mean.dtype)], axis=0)

    # --- one-time tiny param plumbing (off the per-voxel hot path) ---
    bb_w_aug = jnp.concatenate([p["bb_w_t"].T, p["bb_b"].T], axis=1)          # (K, Cin+1)
    seg_b_aug = jnp.concatenate(
        [jnp.zeros((k, cin), x.dtype), p["seg_b"].T], axis=1)                 # (K, Cin+1)
    g_t = p["prompt_graph"].T
    ws_top_t = p["seg_w_t"][:k, :].T
    ws_bot_t = p["seg_w_t"][k:, :].T

    # --- text encoder + full weight folding (Pallas, grid=(1,)) ---
    w_aug = text_encoder_fold(
        pooled_aug, p["organ_embedding"], p["te_w1_t"], p["te_b1"],
        p["te_w2_t"], p["te_b2"], g_t, ws_top_t, ws_bot_t, bb_w_aug, seg_b_aug)
    w_eff = w_aug[:, :cin]                                       # (K, Cin) tiny slices
    b_col = w_aug[:, cin:cin + 1]                                # (K, 1)

    # --- fused per-voxel head on native NCDHW layout (Pallas, no pad/slice) ---
    out = pcnet_head(x.reshape(b, cin, s), w_eff, b_col,
                     ts_max=ts_max, out_dtype=out_dtype)
    return out.reshape(b, k, d, h, w)                            # (B, K, D, H, W)


def pcnet_reference(x, p):
    """Unfused pure-JAX reference following the original op ordering."""
    b, cin, d, h, w = x.shape
    k = p["organ_embedding"].shape[0]
    x_in = jnp.einsum("bcdhw,co->bodhw", x, p["bb_w_t"]) + p["bb_b"][0][None, :, None, None, None]
    gap = _adaptive_avg_pool_to_8(x_in)
    x_feat = gap.reshape(b, k, -1).mean(axis=0)
    feat = jnp.concatenate([x_feat, p["organ_embedding"]], axis=1)
    hdn = feat @ p["te_w1_t"] + p["te_b1"][0]
    hdn = jnp.where(hdn > 0, hdn, 0.01 * hdn)
    weight = hdn @ p["te_w2_t"] + p["te_b2"][0]
    x_out = jnp.einsum("bidhw,oi->bodhw", x_in, weight)
    x_out = jnp.einsum("bkdhw,kj->bjdhw", x_out, p["prompt_graph"])
    cat = jnp.concatenate([x_out, x_in], axis=1)
    seg_w = p["seg_w_t"].T  # (K, 2K)
    return jnp.einsum("bcdhw,oc->bodhw", cat, seg_w) + p["seg_b"][0][None, :, None, None, None]


def init_params(key, in_channels, num_organs, emb_dim=512):
    ks = jax.random.split(key, 8)
    organ_embedding = jax.random.normal(ks[0], (num_organs, emb_dim), jnp.float32) / jnp.sqrt(emb_dim)
    prompt_graph = organ_embedding @ organ_embedding.T                 # (K, K) buffer
    return {
        "organ_embedding": organ_embedding,
        "prompt_graph": prompt_graph,
        # backbone-substitute 1x1x1 conv: (Cin, K) and (1, K)
        "bb_w_t": jax.random.normal(ks[1], (in_channels, num_organs), jnp.float32) / jnp.sqrt(in_channels),
        "bb_b": jax.random.normal(ks[2], (1, num_organs), jnp.float32) * 0.1,
        # text encoder: Linear(1024, 256) then Linear(256, K), stored transposed
        "te_w1_t": jax.random.normal(ks[3], (2 * emb_dim, 256), jnp.float32) / jnp.sqrt(2 * emb_dim),
        "te_b1": jax.random.normal(ks[4], (1, 256), jnp.float32) * 0.1,
        "te_w2_t": jax.random.normal(ks[5], (256, num_organs), jnp.float32) / jnp.sqrt(256),
        "te_b2": jax.random.normal(ks[6], (1, num_organs), jnp.float32) * 0.1,
        # segmentors: Conv3d(2K -> K, 1x1x1, bias), stored as W.T (2K, K)
        "seg_w_t": jax.random.normal(ks[7], (2 * num_organs, num_organs), jnp.float32) / jnp.sqrt(2 * num_organs),
        "seg_b": jnp.zeros((1, num_organs), jnp.float32),
    }


if __name__ == "__main__":
    B, CIN, D, H, W = 2, 4, 16, 16, 16
    NUM_ORGANS = 16  # organ_embedding: (16, 512)

    key = jax.random.PRNGKey(0)
    kx, kp = jax.random.split(key)
    x = jax.random.normal(kx, (B, CIN, D, H, W), jnp.float32)
    params = init_params(kp, CIN, NUM_ORGANS)

    fwd = jax.jit(pcnet_forward)
    out = jax.block_until_ready(fwd(x, params))

    ref = pcnet_reference(x, params)
    assert out.shape == (B, NUM_ORGANS, D, H, W), out.shape
    max_err = float(jnp.max(jnp.abs(out - ref)))
    assert jnp.allclose(out, ref, rtol=1e-3, atol=1e-3), max_err

    # Explicit validation of partial edge-block masking in the head kernel:
    # S = 4096 is NOT a multiple of ts = 768, so the last grid block is partial.
    s_total = D * H * W
    kw, kb = jax.random.split(jax.random.PRNGKey(1))
    w_t = jax.random.normal(kw, (NUM_ORGANS, CIN), jnp.float32)
    b_t = jax.random.normal(kb, (NUM_ORGANS, 1), jnp.float32)
    x_flat = x.reshape(B, CIN, s_total)
    edge = jax.block_until_ready(pcnet_head(x_flat, w_t, b_t, ts=768))
    edge_ref = jnp.einsum("ki,bis->bks", w_t, x_flat) + b_t[None]
    assert edge.shape == (B, NUM_ORGANS, s_total), edge.shape
    max_err_edge = float(jnp.max(jnp.abs(edge - edge_ref)))
    assert jnp.allclose(edge, edge_ref, rtol=1e-3, atol=1e-3), max_err_edge

    print("KERNEL_OK")
</pallas_src>

<mosaic_0001>
module attributes {stable_mosaic.version = 11 : i64} {
  func.func @_te_fold_kernel(%arg0: i32, %arg1: memref<5x512xf32, #tpu.memory_space<vmem>>, %arg2: memref<16x512xf32, #tpu.memory_space<vmem>>, %arg3: memref<1024x256xf32, #tpu.memory_space<vmem>>, %arg4: memref<1x256xf32, #tpu.memory_space<vmem>>, %arg5: memref<256x16xf32, #tpu.memory_space<vmem>>, %arg6: memref<1x16xf32, #tpu.memory_space<vmem>>, %arg7: memref<16x16xf32, #tpu.memory_space<vmem>>, %arg8: memref<16x16xf32, #tpu.memory_space<vmem>>, %arg9: memref<16x16xf32, #tpu.memory_space<vmem>>, %arg10: memref<16x5xf32, #tpu.memory_space<vmem>>, %arg11: memref<16x5xf32, #tpu.memory_space<vmem>>, %arg12: memref<16x5xf32, #tpu.memory_space<vmem>>) attributes {dimension_semantics = [#tpu.dimension_semantics<arbitrary>], iteration_bounds = array<i64: 1>, scalar_prefetch = 0 : i64, scratch_operands = 0 : i64, tpu.core_type = #tpu.core_type<tc>, window_params = [{pipeline_mode = #tpu.pipeline_mode<synchronous>, transform_indices = @transform_0, window_bounds = array<i64: 5, 512>}, {pipeline_mode = #tpu.pipeline_mode<synchronous>, transform_indices = @transform_1, window_bounds = array<i64: 16, 512>}, {pipeline_mode = #tpu.pipeline_mode<synchronous>, transform_indices = @transform_2, window_bounds = array<i64: 1024, 256>}, {pipeline_mode = #tpu.pipeline_mode<synchronous>, transform_indices = @transform_3, window_bounds = array<i64: 1, 256>}, {pipeline_mode = #tpu.pipeline_mode<synchronous>, transform_indices = @transform_4, window_bounds = array<i64: 256, 16>}, {pipeline_mode = #tpu.pipeline_mode<synchronous>, transform_indices = @transform_5, window_bounds = array<i64: 1, 16>}, {pipeline_mode = #tpu.pipeline_mode<synchronous>, transform_indices = @transform_6, window_bounds = array<i64: 16, 16>}, {pipeline_mode = #tpu.pipeline_mode<synchronous>, transform_indices = @transform_7, window_bounds = array<i64: 16, 16>}, {pipeline_mode = #tpu.pipeline_mode<synchronous>, transform_indices = @transform_8, window_bounds = array<i64: 16, 16>}, {pipeline_mode = #tpu.pipeline_mode<synchronous>, transform_indices = @transform_9, window_bounds = array<i64: 16, 5>}, {pipeline_mode = #tpu.pipeline_mode<synchronous>, transform_indices = @transform_10, window_bounds = array<i64: 16, 5>}, {pipeline_mode = #tpu.pipeline_mode<synchronous>, transform_indices = @transform_11, window_bounds = array<i64: 16, 5>}]} {
    %c0 = arith.constant 0 : index
    %c0_0 = arith.constant 0 : index
    %0 = vector.load %arg10[%c0, %c0_0] : memref<16x5xf32, #tpu.memory_space<vmem>>, vector<16x5xf32>
    %c0_1 = arith.constant 0 : index
    %c0_2 = arith.constant 0 : index
    %1 = vector.load %arg1[%c0_1, %c0_2] : memref<5x512xf32, #tpu.memory_space<vmem>>, vector<5x512xf32>
    %cst = arith.constant dense<0.000000e+00> : vector<16x512xf32>
    %2 = tpu.matmul %0, %1, %cst {dimension_numbers = #tpu.dot_dimension_numbers<[1], [0], [0], [1], [0, 0, 1, 1], [], []>} : vector<16x5xf32>, vector<5x512xf32>, vector<16x512xf32> -> vector<16x512xf32>
    %c0_3 = arith.constant 0 : index
    %c0_4 = arith.constant 0 : index
    %3 = vector.load %arg3[%c0_3, %c0_4] : memref<1024x256xf32, #tpu.memory_space<vmem>>, vector<512x256xf32>
    %cst_5 = arith.constant dense<0.000000e+00> : vector<16x256xf32>
    %4 = tpu.matmul %2, %3, %cst_5 {dimension_numbers = #tpu.dot_dimension_numbers<[1], [0], [0], [1], [0, 0, 1, 1], [], []>} : vector<16x512xf32>, vector<512x256xf32>, vector<16x256xf32> -> vector<16x256xf32>
    %c0_6 = arith.constant 0 : index
    %c0_7 = arith.constant 0 : index
    %5 = vector.load %arg2[%c0_6, %c0_7] : memref<16x512xf32, #tpu.memory_space<vmem>>, vector<16x512xf32>
    %c512 = arith.constant 512 : index
    %c0_8 = arith.constant 0 : index
    %6 = vector.load %arg3[%c512, %c0_8] : memref<1024x256xf32, #tpu.memory_space<vmem>>, vector<512x256xf32>
    %cst_9 = arith.constant dense<0.000000e+00> : vector<16x256xf32>
    %7 = tpu.matmul %5, %6, %cst_9 {dimension_numbers = #tpu.dot_dimension_numbers<[1], [0], [0], [1], [0, 0, 1, 1], [], []>} : vector<16x512xf32>, vector<512x256xf32>, vector<16x256xf32> -> vector<16x256xf32>
    %8 = arith.addf %4, %7 : vector<16x256xf32>
    %c0_10 = arith.constant 0 : index
    %c0_11 = arith.constant 0 : index
    %9 = vector.load %arg4[%c0_10, %c0_11] : memref<1x256xf32, #tpu.memory_space<vmem>>, vector<1x256xf32>
    %10 = vector.broadcast %9 : vector<1x256xf32> to vector<16x256xf32>
    %11 = arith.addf %8, %10 : vector<16x256xf32>
    %cst_12 = arith.constant 0.000000e+00 : f32
    %12 = vector.broadcast %cst_12 : f32 to vector<16x256xf32>
    %13 = arith.cmpf ogt, %11, %12 : vector<16x256xf32>
    %cst_13 = arith.constant 0.00999999977 : f32
    %14 = vector.broadcast %cst_13 : f32 to vector<16x256xf32>
    %15 = arith.mulf %14, %11 : vector<16x256xf32>
    %16 = arith.select %13, %11, %15 : vector<16x256xi1>, vector<16x256xf32>
    %c0_14 = arith.constant 0 : index
    %c0_15 = arith.constant 0 : index
    %17 = vector.load %arg5[%c0_14, %c0_15] : memref<256x16xf32, #tpu.memory_space<vmem>>, vector<256x16xf32>
    %cst_16 = arith.constant dense<0.000000e+00> : vector<16x16xf32>
    %18 = tpu.matmul %16, %17, %cst_16 {dimension_numbers = #tpu.dot_dimension_numbers<[1], [0], [0], [1], [0, 0, 1, 1], [], []>} : vector<16x256xf32>, vector<256x16xf32>, vector<16x16xf32> -> vector<16x16xf32>
    %c0_17 = arith.constant 0 : index
    %c0_18 = arith.constant 0 : index
    %19 = vector.load %arg6[%c0_17, %c0_18] : memref<1x16xf32, #tpu.memory_space<vmem>>, vector<1x16xf32>
    %20 = vector.broadcast %19 : vector<1x16xf32> to vector<16x16xf32>
    %21 = arith.addf %18, %20 : vector<16x16xf32>
    %c0_19 = arith.constant 0 : index
    %c0_20 = arith.constant 0 : index
    %22 = vector.load %arg8[%c0_19, %c0_20] : memref<16x16xf32, #tpu.memory_space<vmem>>, vector<16x16xf32>
    %c0_21 = arith.constant 0 : index
    %c0_22 = arith.constant 0 : index
    %23 = vector.load %arg7[%c0_21, %c0_22] : memref<16x16xf32, #tpu.memory_space<vmem>>, vector<16x16xf32>
    %cst_23 = arith.constant dense<0.000000e+00> : vector<16x16xf32>
    %24 = tpu.matmul %23, %21, %cst_23 {dimension_numbers = #tpu.dot_dimension_numbers<[1], [0], [0], [1], [0, 0, 1, 1], [], []>} : vector<16x16xf32>, vector<16x16xf32>, vector<16x16xf32> -> vector<16x16xf32>
    %cst_24 = arith.constant dense<0.000000e+00> : vector<16x16xf32>
    %25 = tpu.matmul %22, %24, %cst_24 {dimension_numbers = #tpu.dot_dimension_numbers<[1], [0], [0], [1], [0, 0, 1, 1], [], []>} : vector<16x16xf32>, vector<16x16xf32>, vector<16x16xf32> -> vector<16x16xf32>
    %c0_25 = arith.constant 0 : index
    %c0_26 = arith.constant 0 : index
    %26 = vector.load %arg9[%c0_25, %c0_26] : memref<16x16xf32, #tpu.memory_space<vmem>>, vector<16x16xf32>
    %27 = arith.addf %25, %26 : vector<16x16xf32>
    %c0_27 = arith.constant 0 : index
    %c0_28 = arith.constant 0 : index
    %28 = vector.load %arg10[%c0_27, %c0_28] : memref<16x5xf32, #tpu.memory_space<vmem>>, vector<16x5xf32>
    %cst_29 = arith.constant dense<0.000000e+00> : vector<16x5xf32>
    %29 = tpu.matmul %27, %28, %cst_29 {dimension_numbers = #tpu.dot_dimension_numbers<[1], [0], [0], [1], [0, 0, 1, 1], [], []>} : vector<16x16xf32>, vector<16x5xf32>, vector<16x5xf32> -> vector<16x5xf32>
    %c0_30 = arith.constant 0 : index
    %c0_31 = arith.constant 0 : index
    %30 = vector.load %arg11[%c0_30, %c0_31] : memref<16x5xf32, #tpu.memory_space<vmem>>, vector<16x5xf32>
    %31 = arith.addf %29, %30 : vector<16x5xf32>
    %c0_32 = arith.constant 0 : index
    %c0_33 = arith.constant 0 : index
    %32 = vector.load %arg12[%c0_32, %c0_33] : memref<16x5xf32, #tpu.memory_space<vmem>>, vector<16x5xf32>
    tpu.vector_store %arg12[%c0_32, %c0_33], %31 {strides = array<i32>} : memref<16x5xf32, #tpu.memory_space<vmem>>, vector<16x5xf32>,
    return
  }
  func.func @transform_0(%arg0: i32) -> (i32, i32) {
    %c0_i32 = arith.constant 0 : i32
    %c0_i32_0 = arith.constant 0 : i32
    %c0_i32_1 = arith.constant 0 : i32
    return %c0_i32, %c0_i32_0 : i32, i32
  }
  func.func @transform_1(%arg0: i32) -> (i32, i32) {
    %c0_i32 = arith.constant 0 : i32
    %c0_i32_0 = arith.constant 0 : i32
    %c0_i32_1 = arith.constant 0 : i32
    return %c0_i32, %c0_i32_0 : i32, i32
  }
  func.func @transform_2(%arg0: i32) -> (i32, i32) {
    %c0_i32 = arith.constant 0 : i32
    %c0_i32_0 = arith.constant 0 : i32
    %c0_i32_1 = arith.constant 0 : i32
    return %c0_i32, %c0_i32_0 : i32, i32
  }
  func.func @transform_3(%arg0: i32) -> (i32, i32) {
    %c0_i32 = arith.constant 0 : i32
    %c0_i32_0 = arith.constant 0 : i32
    %c0_i32_1 = arith.constant 0 : i32
    return %c0_i32, %c0_i32_0 : i32, i32
  }
  func.func @transform_4(%arg0: i32) -> (i32, i32) {
    %c0_i32 = arith.constant 0 : i32
    %c0_i32_0 = arith.constant 0 : i32
    %c0_i32_1 = arith.constant 0 : i32
    return %c0_i32, %c0_i32_0 : i32, i32
  }
  func.func @transform_5(%arg0: i32) -> (i32, i32) {
    %c0_i32 = arith.constant 0 : i32
    %c0_i32_0 = arith.constant 0 : i32
    %c0_i32_1 = arith.constant 0 : i32
    return %c0_i32, %c0_i32_0 : i32, i32
  }
  func.func @transform_6(%arg0: i32) -> (i32, i32) {
    %c0_i32 = arith.constant 0 : i32
    %c0_i32_0 = arith.constant 0 : i32
    %c0_i32_1 = arith.constant 0 : i32
    return %c0_i32, %c0_i32_0 : i32, i32
  }
  func.func @transform_7(%arg0: i32) -> (i32, i32) {
    %c0_i32 = arith.constant 0 : i32
    %c0_i32_0 = arith.constant 0 : i32
    %c0_i32_1 = arith.constant 0 : i32
    return %c0_i32, %c0_i32_0 : i32, i32
  }
  func.func @transform_8(%arg0: i32) -> (i32, i32) {
    %c0_i32 = arith.constant 0 : i32
    %c0_i32_0 = arith.constant 0 : i32
    %c0_i32_1 = arith.constant 0 : i32
    return %c0_i32, %c0_i32_0 : i32, i32
  }
  func.func @transform_9(%arg0: i32) -> (i32, i32) {
    %c0_i32 = arith.constant 0 : i32
    %c0_i32_0 = arith.constant 0 : i32
    %c0_i32_1 = arith.constant 0 : i32
    return %c0_i32, %c0_i32_0 : i32, i32
  }
  func.func @transform_10(%arg0: i32) -> (i32, i32) {
    %c0_i32 = arith.constant 0 : i32
    %c0_i32_0 = arith.constant 0 : i32
    %c0_i32_1 = arith.constant 0 : i32
    return %c0_i32, %c0_i32_0 : i32, i32
  }
  func.func @transform_11(%arg0: i32) -> (i32, i32) {
    %c0_i32 = arith.constant 0 : i32
    %c0_i32_0 = arith.constant 0 : i32
    %c0_i32_1 = arith.constant 0 : i32
    return %c0_i32, %c0_i32_0 : i32, i32
  }
}

module attributes {stable_mosaic.version = 11 : i64} {
  func.func @_head_kernel(%arg0: i32, %arg1: i32, %arg2: memref<1x4x1024xf32, #tpu.memory_space<vmem>>, %arg3: memref<16x4xf32, #tpu.memory_space<vmem>>, %arg4: memref<16x1xf32, #tpu.memory_space<vmem>>, %arg5: memref<1x16x1024xf32, #tpu.memory_space<vmem>>) attributes {dimension_semantics = [#tpu.dimension_semantics<parallel>, #tpu.dimension_semantics<parallel>], iteration_bounds = array<i64: 2, 4>, scalar_prefetch = 0 : i64, scratch_operands = 0 : i64, tpu.core_type = #tpu.core_type<tc>, window_params = [{transform_indices = @transform_0, window_bounds = array<i64: 1, 4, 1024>}, {pipeline_mode = #tpu.pipeline_mode<synchronous>, transform_indices = @transform_1, window_bounds = array<i64: 16, 4>}, {pipeline_mode = #tpu.pipeline_mode<synchronous>, transform_indices = @transform_2, window_bounds = array<i64: 16, 1>}, {transform_indices = @transform_3, window_bounds = array<i64: 1, 16, 1024>}]} {
    %c0 = arith.constant 0 : index
    %c0_0 = arith.constant 0 : index
    %0 = vector.load %arg3[%c0, %c0_0] : memref<16x4xf32, #tpu.memory_space<vmem>>, vector<16x4xf32>
    %c0_1 = arith.constant 0 : index
    %c0_2 = arith.constant 0 : index
    %c0_3 = arith.constant 0 : index
    %1 = vector.load %arg2[%c0_1, %c0_2, %c0_3] : memref<1x4x1024xf32, #tpu.memory_space<vmem>>, vector<1x4x1024xf32>
    %2 = vector.shape_cast %1 : vector<1x4x1024xf32> to vector<4x1024xf32>
    %cst = arith.constant dense<0.000000e+00> : vector<16x1024xf32>
    %3 = tpu.matmul %0, %2, %cst {dimension_numbers = #tpu.dot_dimension_numbers<[1], [0], [0], [1], [0, 0, 1, 1], [], []>} : vector<16x4xf32>, vector<4x1024xf32>, vector<16x1024xf32> -> vector<16x1024xf32>
    %c0_4 = arith.constant 0 : index
    %c0_5 = arith.constant 0 : index
    %4 = vector.load %arg4[%c0_4, %c0_5] : memref<16x1xf32, #tpu.memory_space<vmem>>, vector<16x1xf32>
    %5 = vector.broadcast %4 : vector<16x1xf32> to vector<16x1024xf32>
    %6 = arith.addf %3, %5 : vector<16x1024xf32>
    %c0_6 = arith.constant 0 : index
    %c0_7 = arith.constant 0 : index
    %c0_8 = arith.constant 0 : index
    %7 = vector.load %arg5[%c0_6, %c0_7, %c0_8] : memref<1x16x1024xf32, #tpu.memory_space<vmem>>, vector<1x16x1024xf32>
    %8 = vector.shape_cast %7 : vector<1x16x1024xf32> to vector<16x1024xf32>
    %9 = vector.shape_cast %6 : vector<16x1024xf32> to vector<1x16x1024xf32>
    tpu.vector_store %arg5[%c0_6, %c0_7, %c0_8], %9 {strides = array<i32>} : memref<1x16x1024xf32, #tpu.memory_space<vmem>>, vector<1x16x1024xf32>,
    return
  }
  func.func @transform_0(%arg0: i32, %arg1: i32) -> (i32, i32, i32) {
    %c0_i32 = arith.constant 0 : i32
    %c0_i32_0 = arith.constant 0 : i32
    return %arg0, %c0_i32, %arg1 : i32, i32, i32
  }
  func.func @transform_1(%arg0: i32, %arg1: i32) -> (i32, i32) {
    %c0_i32 = arith.constant 0 : i32
    %c0_i32_0 = arith.constant 0 : i32
    %c0_i32_1 = arith.constant 0 : i32
    return %c0_i32, %c0_i32_0 : i32, i32
  }
  func.func @transform_2(%arg0: i32, %arg1: i32) -> (i32, i32) {
    %c0_i32 = arith.constant 0 : i32
    %c0_i32_0 = arith.constant 0 : i32
    %c0_i32_1 = arith.constant 0 : i32
    return %c0_i32, %c0_i32_0 : i32, i32
  }
  func.func @transform_3(%arg0: i32, %arg1: i32) -> (i32, i32, i32) {
    %c0_i32 = arith.constant 0 : i32
    %c0_i32_0 = arith.constant 0 : i32
    return %arg0, %c0_i32, %arg1 : i32, i32, i32
  }
}

</mosaic_0001>

<llo_original>
// kernel: pcnet_forward.2
$region0: #{pcnet_forward.2}
  #allocation0 [shape = 'u32[]', space=smem, size = 0x4, offset = 0x4, fixed_abs, tag = 'smem constant byte address 0x4 - core index']
  #allocation1 [shape = 'u32[144,128]{1,0:T(1,128)}', space=vmem, size = 0x12000, scoped, tag = 'internal scratch']
  %s0 = inlined_call_operand.vmem [shape: f32[5,512], index: 0, kind: input, shape index: {}]
  %s1 = inlined_call_operand.vmem [shape: f32[16,512], index: 1, kind: input, shape index: {}]
  %s2 = inlined_call_operand.vmem [shape: f32[1024,256], index: 2, kind: input, shape index: {}]
  %s3 = inlined_call_operand.vmem [shape: f32[1,256], index: 3, kind: input, shape index: {}]
  %s4 = inlined_call_operand.vmem [shape: f32[256,16], index: 4, kind: input, shape index: {}]
  %s5 = inlined_call_operand.vmem [shape: f32[1,16], index: 5, kind: input, shape index: {}]
  %s6 = inlined_call_operand.vmem [shape: f32[16,16], index: 6, kind: input, shape index: {}]
  %s7 = inlined_call_operand.vmem [shape: f32[16,16], index: 7, kind: input, shape index: {}]
  %s8 = inlined_call_operand.vmem [shape: f32[16,16], index: 8, kind: input, shape index: {}]
  %s9 = inlined_call_operand.vmem [shape: f32[16,5], index: 9, kind: input, shape index: {}]
  %s10 = inlined_call_operand.vmem [shape: f32[16,5], index: 10, kind: input, shape index: {}]
  %s11 = inlined_call_operand.vmem [shape: f32[16,5], index: 11, kind: output, shape index: {}]
  %s12 = sld [smem:[#allocation0]]
  $region54: #{pcnet_forward.2} parent=0
    _
  %s14 = ssub.s32 1, %s12
  %s15 = scalar_select 0, %s14, %s12
  // Predicated region
  $region2: #{pcnet_forward.2} parent=0 // pred_check
    _
  $region3: #{pcnet_forward.2} parent=0 // pred_check_branch
    %17 = sbr.rel (0) target = $region5
  $region4: #{pcnet_forward.2} parent=0 // pred_region
    _
  $region5: #{pcnet_forward.2} parent=0 // pred_fallthru
    _
  // Predicated region
  $region6: #{pcnet_forward.2} parent=0 // pred_check
    _
  $region7: #{pcnet_forward.2} parent=0 // pred_check_branch
    %19 = sbr.rel (0) target = $region9
  $region8: #{pcnet_forward.2} parent=0 // pred_region
    _
  $region9: #{pcnet_forward.2} parent=0 // pred_fallthru
    _
  // Predicated region
  $region10: #{pcnet_forward.2} parent=0 // pred_check
    _
  $region11: #{pcnet_forward.2} parent=0 // pred_check_branch
    %21 = sbr.rel (0) target = $region13
  $region12: #{pcnet_forward.2} parent=0 // pred_region
    _
  $region13: #{pcnet_forward.2} parent=0 // pred_fallthru
    _
  // Predicated region
  $region14: #{pcnet_forward.2} parent=0 // pred_check
    _
  $region15: #{pcnet_forward.2} parent=0 // pred_check_branch
    %23 = sbr.rel (0) target = $region17
  $region16: #{pcnet_forward.2} parent=0 // pred_region
    _
  $region17: #{pcnet_forward.2} parent=0 // pred_fallthru
    _
  // Predicated region
  $region18: #{pcnet_forward.2} parent=0 // pred_check
    _
  $region19: #{pcnet_forward.2} parent=0 // pred_check_branch
    %25 = sbr.rel (0) target = $region21
  $region20: #{pcnet_forward.2} parent=0 // pred_region
    _
  $region21: #{pcnet_forward.2} parent=0 // pred_fallthru
    _
  // Predicated region
  $region22: #{pcnet_forward.2} parent=0 // pred_check
    _
  $region23: #{pcnet_forward.2} parent=0 // pred_check_branch
    %27 = sbr.rel (0) target = $region25
  $region24: #{pcnet_forward.2} parent=0 // pred_region
    _
  $region25: #{pcnet_forward.2} parent=0 // pred_fallthru
    _
  // Predicated region
  $region26: #{pcnet_forward.2} parent=0 // pred_check
    _
  $region27: #{pcnet_forward.2} parent=0 // pred_check_branch
    %29 = sbr.rel (0) target = $region29
  $region28: #{pcnet_forward.2} parent=0 // pred_region
    _
  $region29: #{pcnet_forward.2} parent=0 // pred_fallthru
    _
  // Predicated region
  $region30: #{pcnet_forward.2} parent=0 // pred_check
    _
  $region31: #{pcnet_forward.2} parent=0 // pred_check_branch
    %31 = sbr.rel (0) target = $region33
  $region32: #{pcnet_forward.2} parent=0 // pred_region
    _
  $region33: #{pcnet_forward.2} parent=0 // pred_fallthru
    _
  // Predicated region
  $region34: #{pcnet_forward.2} parent=0 // pred_check
    _
  $region35: #{pcnet_forward.2} parent=0 // pred_check_branch
    %33 = sbr.rel (0) target = $region37
  $region36: #{pcnet_forward.2} parent=0 // pred_region
    _
  $region37: #{pcnet_forward.2} parent=0 // pred_fallthru
    _
  // Predicated region
  $region38: #{pcnet_forward.2} parent=0 // pred_check
    _
  $region39: #{pcnet_forward.2} parent=0 // pred_check_branch
    %35 = sbr.rel (0) target = $region41
  $region40: #{pcnet_forward.2} parent=0 // pred_region
    _
  $region41: #{pcnet_forward.2} parent=0 // pred_fallthru
    _
  // Predicated region
  $region42: #{pcnet_forward.2} parent=0 // pred_check
    _
  $region43: #{pcnet_forward.2} parent=0 // pred_check_branch
    %37 = sbr.rel (0) target = $region45
  $region44: #{pcnet_forward.2} parent=0 // pred_region
    _
  $region45: #{pcnet_forward.2} parent=0 // pred_fallthru
    _
  %v38 = vld [vmem:[%s9] sm:$0xff]
  %v39 = vld [vmem:[%s9 + $0x8] sm:$0xff]
  %v40 = vld [vmem:[%s0] sm:$0x1f]
  %v41 = vld [vmem:[%s0 + $0x8] sm:$0x1f]
  %v42 = vld [vmem:[%s0 + $0x10] sm:$0x1f]
  %v43 = vld [vmem:[%s0 + $0x18] sm:$0x1f]
  %vm44 = vcmask 39936
  %v46 = vsel %vm44, %v38, 0
  %v49 = vsel %vm44, %v39, 0
  %vm51 = vcmask 1044480
  %v53 = vsel %vm51, %v40, 0
  %v56 = vsel %vm51, %v41, 0
  %v59 = vsel %vm51, %v42, 0
  %v62 = vsel %vm51, %v43, 0
  %64 = vmatprep.subr.mxu0 %v56
  %65 = vmatpush1.msra.mxu0 %v53
  %66 = vmatprep.subr.mxu0 0.0
  %67 = vmatpush1.msra.mxu0 0.0
  %68 = vmatprep.subr.mxu0 0.0
  %69 = vmatpush1.msra.mxu0 0.0
  %70 = vmatprep.subr.mxu0 0.0
  %71 = vmatpush1.msra.mxu0 0.0
  %72 = vmatprep.subr.mxu0 0.0
  %73 = vmatpush1.msra.mxu0 0.0
  %74 = vmatprep.subr.mxu0 0.0
  %75 = vmatpush1.msra.mxu0 0.0
  %76 = vmatprep.subr.mxu0 0.0
  %77 = vmatpush1.msra.mxu0 0.0
  %78 = vmatprep.subr.mxu0 0.0
  %79 = vmatpush1.msra.mxu0 0.0
  %80 = vmatprep.subr.mxu0 0.0
  %81 = vmatpush1.msra.mxu0 0.0
  %82 = vmatprep.subr.mxu0 0.0
  %83 = vmatpush1.msra.mxu0 0.0
  %84 = vmatprep.subr.mxu0 0.0
  %85 = vmatpush1.msra.mxu0 0.0
  %86 = vmatprep.subr.mxu0 0.0
  %87 = vmatpush1.msra.mxu0 0.0
  %88 = vmatprep.subr.mxu0 0.0
  %89 = vmatpush1.msra.mxu0 0.0
  %90 = vmatprep.subr.mxu0 0.0
  %91 = vmatpush1.msra.mxu0 0.0
  %92 = vmatprep.subr.mxu0 0.0
  %93 = vmatpush1.msra.mxu0 0.0
  %94 = vmatprep.subr.mxu0 0.0
  %95 = vmatpush1.msra.mxu0 0.0
  %96 = vmatprep.subr.mxu0 0.0
  %97 = vmatpush1.msra.mxu0 0.0
  %98 = vmatprep.subr.mxu0 0.0
  %99 = vmatpush1.msra.mxu0 0.0
  %100 = vmatprep.subr.mxu0 0.0
  %101 = vmatpush1.msra.mxu0 0.0
  %102 = vmatprep.subr.mxu0 0.0
  %103 = vmatpush1.msra.mxu0 0.0
  %104 = vmatprep.subr.mxu0 0.0
  %105 = vmatpush1.msra.mxu0 0.0
  %106 = vmatprep.subr.mxu0 0.0
  %107 = vmatpush1.msra.mxu0 0.0
  %108 = vmatprep.subr.mxu0 0.0
  %109 = vmatpush1.msra.mxu0 0.0
  %110 = vmatprep.subr.mxu0 0.0
  %111 = vmatpush1.msra.mxu0 0.0
  %112 = vmatprep.subr.mxu0 0.0
  %113 = vmatpush1.msra.mxu0 0.0
  %114 = vmatprep.subr.mxu0 0.0
  %115 = vmatpush1.msra.mxu0 0.0
  %116 = vmatprep.subr.mxu0 0.0
  %117 = vmatpush1.msra.mxu0 0.0
  %118 = vmatprep.subr.mxu0 0.0
  %119 = vmatpush1.msra.mxu0 0.0
  %120 = vmatprep.subr.mxu0 0.0
  %121 = vmatpush1.msra.mxu0 0.0
  %122 = vmatprep.subr.mxu0 0.0
  %123 = vmatpush1.msra.mxu0 0.0
  %124 = vmatprep.subr.mxu0 0.0
  %125 = vmatpush1.msra.mxu0 0.0
  %126 = vmatprep.subr.mxu0 0.0
  %127 = vmatpush1.msra.mxu0 0.0
  %128 = vmatprep.mubr.f32.mxu0 0.0
  %129 = vmatmul.mubr.f32.gmra.mrb[0].mxu0 %v46
  %v130 = vpop.f32.mrb[0].mxu0
  %v131 = vadd.f32 0.0, %v130
  %v132 = vpop.f32.mrb[0].mxu0
  %v133 = vadd.f32 0.0, %v132
  %134 = vmatprep.mubr.f32.mxu0 0.0
  %135 = vmatmul.mubr.f32.gmra.mrb[0].mxu0 %v49
  %v136 = vpop.f32.mrb[0].mxu0
  %v137 = vadd.f32 0.0, %v136
  %v138 = vpop.f32.mrb[0].mxu0
  %v139 = vadd.f32 0.0, %v138
  %140 = vdwg.mxu0
  %141 = vmatprep.subr.mxu0 %v62
  %142 = vmatpush1.msra.mxu0 %v59
  %143 = vmatprep.subr.mxu0 0.0
  %144 = vmatpush1.msra.mxu0 0.0
  %145 = vmatprep.subr.mxu0 0.0
  %146 = vmatpush1.msra.mxu0 0.0
  %147 = vmatprep.subr.mxu0 0.0
  %148 = vmatpush1.msra.mxu0 0.0
  %149 = vmatprep.subr.mxu0 0.0
  %150 = vmatpush1.msra.mxu0 0.0
  %151 = vmatprep.subr.mxu0 0.0
  %152 = vmatpush1.msra.mxu0 0.0
  %153 = vmatprep.subr.mxu0 0.0
  %154 = vmatpush1.msra.mxu0 0.0
  %155 = vmatprep.subr.mxu0 0.0
  %156 = vmatpush1.msra.mxu0 0.0
  %157 = vmatprep.subr.mxu0 0.0
  %158 = vmatpush1.msra.mxu0 0.0
  %159 = vmatprep.subr.mxu0 0.0
  %160 = vmatpush1.msra.mxu0 0.0
  %161 = vmatprep.subr.mxu0 0.0
  %162 = vmatpush1.msra.mxu0 0.0
  %163 = vmatprep.subr.mxu0 0.0
  %164 = vmatpush1.msra.mxu0 0.0
  %165 = vmatprep.subr.mxu0 0.0
  %166 = vmatpush1.msra.mxu0 0.0
  %167 = vmatprep.subr.mxu0 0.0
  %168 = vmatpush1.msra.mxu0 0.0
  %169 = vmatprep.subr.mxu0 0.0
  %170 = vmatpush1.msra.mxu0 0.0
  %171 = vmatprep.subr.mxu0 0.0
  %172 = vmatpush1.msra.mxu0 0.0
  %173 = vmatprep.subr.mxu0 0.0
  %174 = vmatpush1.msra.mxu0 0.0
  %175 = vmatprep.subr.mxu0 0.0
  %176 = vmatpush1.msra.mxu0 0.0
  %177 = vmatprep.subr.mxu0 0.0
  %178 = vmatpush1.msra.mxu0 0.0
  %179 = vmatprep.subr.mxu0 0.0
  %180 = vmatpush1.msra.mxu0 0.0
  %181 = vmatprep.subr.mxu0 0.0
  %182 = vmatpush1.msra.mxu0 0.0
  %183 = vmatprep.subr.mxu0 0.0
  %184 = vmatpush1.msra.mxu0 0.0
  %185 = vmatprep.subr.mxu0 0.0
  %186 = vmatpush1.msra.mxu0 0.0
  %187 = vmatprep.subr.mxu0 0.0
  %188 = vmatpush1.msra.mxu0 0.0
  %189 = vmatprep.subr.mxu0 0.0
  %190 = vmatpush1.msra.mxu0 0.0
  %191 = vmatprep.subr.mxu0 0.0
  %192 = vmatpush1.msra.mxu0 0.0
  %193 = vmatprep.subr.mxu0 0.0
  %194 = vmatpush1.msra.mxu0 0.0
  %195 = vmatprep.subr.mxu0 0.0
  %196 = vmatpush1.msra.mxu0 0.0
  %197 = vmatprep.subr.mxu0 0.0
  %198 = vmatpush1.msra.mxu0 0.0
  %199 = vmatprep.subr.mxu0 0.0
  %200 = vmatpush1.msra.mxu0 0.0
  %201 = vmatprep.subr.mxu0 0.0
  %202 = vmatpush1.msra.mxu0 0.0
  %203 = vmatprep.subr.mxu0 0.0
  %204 = vmatpush1.msra.mxu0 0.0
  %205 = vmatprep.mubr.f32.mxu0 0.0
  %206 = vmatmul.mubr.f32.gmra.mrb[0].mxu0 %v46
  %v207 = vpop.f32.mrb[0].mxu0
  %v208 = vadd.f32 0.0, %v207
  %v209 = vpop.f32.mrb[0].mxu0
  %v210 = vadd.f32 0.0, %v209
  %211 = vmatprep.mubr.f32.mxu0 0.0
  %212 = vmatmul.mubr.f32.gmra.mrb[0].mxu0 %v49
  %v213 = vpop.f32.mrb[0].mxu0
  %v214 = vadd.f32 0.0, %v213
  %v215 = vpop.f32.mrb[0].mxu0
  %v216 = vadd.f32 0.0, %v215
  %217 = vdwg.mxu0
  %v218 = vld [vmem:[%s2] sm:$0xff]
  %v219 = vld [vmem:[%s2 + $0x8] sm:$0xff]
  %v220 = vld [vmem:[%s2 + $0x10] sm:$0xff]
  %v221 = vld [vmem:[%s2 + $0x18] sm:$0xff]
  %v222 = vld [vmem:[%s2 + $0x20] sm:$0xff]
  %v223 = vld [vmem:[%s2 + $0x28] sm:$0xff]
  %v224 = vld [vmem:[%s2 + $0x30] sm:$0xff]
  %v225 = vld [vmem:[%s2 + $0x38] sm:$0xff]
  %v226 = vld [vmem:[%s2 + $0x40] sm:$0xff]
  %v227 = vld [vmem:[%s2 + $0x48] sm:$0xff]
  %v228 = vld [vmem:[%s2 + $0x50] sm:$0xff]
  %v229 = vld [vmem:[%s2 + $0x58] sm:$0xff]
  %v230 = vld [vmem:[%s2 + $0x60] sm:$0xff]
  %v231 = vld [vmem:[%s2 + $0x68] sm:$0xff]
  %v232 = vld [vmem:[%s2 + $0x70] sm:$0xff]
  %v233 = vld [vmem:[%s2 + $0x78] sm:$0xff]
  %v234 = vld [vmem:[%s2 + $0x80] sm:$0xff]
  %v235 = vld [vmem:[%s2 + $0x88] sm:$0xff]
  %v236 = vld [vmem:[%s2 + $0x90] sm:$0xff]
  %v237 = vld [vmem:[%s2 + $0x98] sm:$0xff]
  %v238 = vld [vmem:[%s2 + $0xa0] sm:$0xff]
  %v239 = vld [vmem:[%s2 + $0xa8] sm:$0xff]
  %v240 = vld [vmem:[%s2 + $0xb0] sm:$0xff]
  %v241 = vld [vmem:[%s2 + $0xb8] sm:$0xff]
  %v242 = vld [vmem:[%s2 + $0xc0] sm:$0xff]
  %v243 = vld [vmem:[%s2 + $0xc8] sm:$0xff]
  %v244 = vld [vmem:[%s2 + $0xd0] sm:$0xff]
  %v245 = vld [vmem:[%s2 + $0xd8] sm:$0xff]
  %v246 = vld [vmem:[%s2 + $0xe0] sm:$0xff]
  %v247 = vld [vmem:[%s2 + $0xe8] sm:$0xff]
  %v248 = vld [vmem:[%s2 + $0xf0] sm:$0xff]
  %v249 = vld [vmem:[%s2 + $0xf8] sm:$0xff]
  %v250 = vld [vmem:[%s2 + $0x100] sm:$0xff]
  %v251 = vld [vmem:[%s2 + $0x108] sm:$0xff]
  %v252 = vld [vmem:[%s2 + $0x110] sm:$0xff]
  %v253 = vld [vmem:[%s2 + $0x118] sm:$0xff]
  %v254 = vld [vmem:[%s2 + $0x120] sm:$0xff]
  %v255 = vld [vmem:[%s2 + $0x128] sm:$0xff]
  %v256 = vld [vmem:[%s2 + $0x130] sm:$0xff]
  %v257 = vld [vmem:[%s2 + $0x138] sm:$0xff]
  %v258 = vld [vmem:[%s2 + $0x140] sm:$0xff]
  %v259 = vld [vmem:[%s2 + $0x148] sm:$0xff]
  %v260 = vld [vmem:[%s2 + $0x150] sm:$0xff]
  %v261 = vld [vmem:[%s2 + $0x158] sm:$0xff]
  %v262 = vld [vmem:[%s2 + $0x160] sm:$0xff]
  %v263 = vld [vmem:[%s2 + $0x168] sm:$0xff]
  %v264 = vld [vmem:[%s2 + $0x170] sm:$0xff]
  %v265 = vld [vmem:[%s2 + $0x178] sm:$0xff]
  %v266 = vld [vmem:[%s2 + $0x180] sm:$0xff]
  %v267 = vld [vmem:[%s2 + $0x188] sm:$0xff]
  %v268 = vld [vmem:[%s2 + $0x190] sm:$0xff]
  %v269 = vld [vmem:[%s2 + $0x198] sm:$0xff]
  %v270 = vld [vmem:[%s2 + $0x1a0] sm:$0xff]
  %v271 = vld [vmem:[%s2 + $0x1a8] sm:$0xff]
  %v272 = vld [vmem:[%s2 + $0x1b0] sm:$0xff]
  %v273 = vld [vmem:[%s2 + $0x1b8] sm:$0xff]
  %v274 = vld [vmem:[%s2 + $0x1c0] sm:$0xff]
  %v275 = vld [vmem:[%s2 + $0x1c8] sm:$0xff]
  %v276 = vld [vmem:[%s2 + $0x1d0] sm:$0xff]
  %v277 = vld [vmem:[%s2 + $0x1d8] sm:$0xff]
  %v278 = vld [vmem:[%s2 + $0x1e0] sm:$0xff]
  %v279 = vld [vmem:[%s2 + $0x1e8] sm:$0xff]
  %v280 = vld [vmem:[%s2 + $0x1f0] sm:$0xff]
  %v281 = vld [vmem:[%s2 + $0x1f8] sm:$0xff]
  %v282 = vld [vmem:[%s2 + $0x200] sm:$0xff]
  %v283 = vld [vmem:[%s2 + $0x208] sm:$0xff]
  %v284 = vld [vmem:[%s2 + $0x210] sm:$0xff]
  %v285 = vld [vmem:[%s2 + $0x218] sm:$0xff]
  %v286 = vld [vmem:[%s2 + $0x220] sm:$0xff]
  %v287 = vld [vmem:[%s2 + $0x228] sm:$0xff]
  %v288 = vld [vmem:[%s2 + $0x230] sm:$0xff]
  %v289 = vld [vmem:[%s2 + $0x238] sm:$0xff]
  %v290 = vld [vmem:[%s2 + $0x240] sm:$0xff]
  %v291 = vld [vmem:[%s2 + $0x248] sm:$0xff]
  %v292 = vld [vmem:[%s2 + $0x250] sm:$0xff]
  %v293 = vld [vmem:[%s2 + $0x258] sm:$0xff]
  %v294 = vld [vmem:[%s2 + $0x260] sm:$0xff]
  %v295 = vld [vmem:[%s2 + $0x268] sm:$0xff]
  %v296 = vld [vmem:[%s2 + $0x270] sm:$0xff]
  %v297 = vld [vmem:[%s2 + $0x278] sm:$0xff]
  %v298 = vld [vmem:[%s2 + $0x280] sm:$0xff]
  %v299 = vld [vmem:[%s2 + $0x288] sm:$0xff]
  %v300 = vld [vmem:[%s2 + $0x290] sm:$0xff]
  %v301 = vld [vmem:[%s2 + $0x298] sm:$0xff]
  %v302 = vld [vmem:[%s2 + $0x2a0] sm:$0xff]
  %v303 = vld [vmem:[%s2 + $0x2a8] sm:$0xff]
  %v304 = vld [vmem:[%s2 + $0x2b0] sm:$0xff]
  %v305 = vld [vmem:[%s2 + $0x2b8] sm:$0xff]
  %v306 = vld [vmem:[%s2 + $0x2c0] sm:$0xff]
  %v307 = vld [vmem:[%s2 + $0x2c8] sm:$0xff]
  %v308 = vld [vmem:[%s2 + $0x2d0] sm:$0xff]
  %v309 = vld [vmem:[%s2 + $0x2d8] sm:$0xff]
  %v310 = vld [vmem:[%s2 + $0x2e0] sm:$0xff]
  %v311 = vld [vmem:[%s2 + $0x2e8] sm:$0xff]
  %v312 = vld [vmem:[%s2 + $0x2f0] sm:$0xff]
  %v313 = vld [vmem:[%s2 + $0x2f8] sm:$0xff]
  %v314 = vld [vmem:[%s2 + $0x300] sm:$0xff]
  %v315 = vld [vmem:[%s2 + $0x308] sm:$0xff]
  %v316 = vld [vmem:[%s2 + $0x310] sm:$0xff]
  %v317 = vld [vmem:[%s2 + $0x318] sm:$0xff]
  %v318 = vld [vmem:[%s2 + $0x320] sm:$0xff]
  %v319 = vld [vmem:[%s2 + $0x328] sm:$0xff]
  %v320 = vld [vmem:[%s2 + $0x330] sm:$0xff]
  %v321 = vld [vmem:[%s2 + $0x338] sm:$0xff]
  %v322 = vld [vmem:[%s2 + $0x340] sm:$0xff]
  %v323 = vld [vmem:[%s2 + $0x348] sm:$0xff]
  %v324 = vld [vmem:[%s2 + $0x350] sm:$0xff]
  %v325 = vld [vmem:[%s2 + $0x358] sm:$0xff]
  %v326 = vld [vmem:[%s2 + $0x360] sm:$0xff]
  %v327 = vld [vmem:[%s2 + $0x368] sm:$0xff]
  %v328 = vld [vmem:[%s2 + $0x370] sm:$0xff]
  %v329 = vld [vmem:[%s2 + $0x378] sm:$0xff]
  %v330 = vld [vmem:[%s2 + $0x380] sm:$0xff]
  %v331 = vld [vmem:[%s2 + $0x388] sm:$0xff]
  %v332 = vld [vmem:[%s2 + $0x390] sm:$0xff]
  %v333 = vld [vmem:[%s2 + $0x398] sm:$0xff]
  %v334 = vld [vmem:[%s2 + $0x3a0] sm:$0xff]
  %v335 = vld [vmem:[%s2 + $0x3a8] sm:$0xff]
  %v336 = vld [vmem:[%s2 + $0x3b0] sm:$0xff]
  %v337 = vld [vmem:[%s2 + $0x3b8] sm:$0xff]
  %v338 = vld [vmem:[%s2 + $0x3c0] sm:$0xff]
  %v339 = vld [vmem:[%s2 + $0x3c8] sm:$0xff]
  %v340 = vld [vmem:[%s2 + $0x3d0] sm:$0xff]
  %v341 = vld [vmem:[%s2 + $0x3d8] sm:$0xff]
  %v342 = vld [vmem:[%s2 + $0x3e0] sm:$0xff]
  %v343 = vld [vmem:[%s2 + $0x3e8] sm:$0xff]
  %v344 = vld [vmem:[%s2 + $0x3f0] sm:$0xff]
  %v345 = vld [vmem:[%s2 + $0x3f8] sm:$0xff]
  %v346 = vld [vmem:[%s1] sm:$0xff]
  %v347 = vld [vmem:[%s1 + $0x8] sm:$0xff]
  %v348 = vld [vmem:[%s1 + $0x10] sm:$0xff]
  %v349 = vld [vmem:[%s1 + $0x18] sm:$0xff]
  %v350 = vld [vmem:[%s1 + $0x20] sm:$0xff]
  %v351 = vld [vmem:[%s1 + $0x28] sm:$0xff]
  %v352 = vld [vmem:[%s1 + $0x30] sm:$0xff]
  %v353 = vld [vmem:[%s1 + $0x38] sm:$0xff]
  %v354 = vld [vmem:[%s2 + $0x400] sm:$0xff]
  %v355 = vld [vmem:[%s2 + $0x408] sm:$0xff]
  %v356 = vld [vmem:[%s2 + $0x410] sm:$0xff]
  %v357 = vld [vmem:[%s2 + $0x418] sm:$0xff]
  %v358 = vld [vmem:[%s2 + $0x420] sm:$0xff]
  %v359 = vld [vmem:[%s2 + $0x428] sm:$0xff]
  %v360 = vld [vmem:[%s2 + $0x430] sm:$0xff]
  %v361 = vld [vmem:[%s2 + $0x438] sm:$0xff]
  %v362 = vld [vmem:[%s2 + $0x440] sm:$0xff]
  %v363 = vld [vmem:[%s2 + $0x448] sm:$0xff]
  %v364 = vld [vmem:[%s2 + $0x450] sm:$0xff]
  %v365 = vld [vmem:[%s2 + $0x458] sm:$0xff]
  %v366 = vld [vmem:[%s2 + $0x460] sm:$0xff]
  %v367 = vld [vmem:[%s2 + $0x468] sm:$0xff]
  %v368 = vld [vmem:[%s2 + $0x470] sm:$0xff]
  %v369 = vld [vmem:[%s2 + $0x478] sm:$0xff]
  %v370 = vld [vmem:[%s2 + $0x480] sm:$0xff]
  %v371 = vld [vmem:[%s2 + $0x488] sm:$0xff]
  %v372 = vld [vmem:[%s2 + $0x490] sm:$0xff]
  %v373 = vld [vmem:[%s2 + $0x498] sm:$0xff]
  %v374 = vld [vmem:[%s2 + $0x4a0] sm:$0xff]
  %v375 = vld [vmem:[%s2 + $0x4a8] sm:$0xff]
  %v376 = vld [vmem:[%s2 + $0x4b0] sm:$0xff]
  %v377 = vld [vmem:[%s2 + $0x4b8] sm:$0xff]
  %v378 = vld [vmem:[%s2 + $0x4c0] sm:$0xff]
  %v379 = vld [vmem:[%s2 + $0x4c8] sm:$0xff]
  %v380 = vld [vmem:[%s2 + $0x4d0] sm:$0xff]
  %v381 = vld [vmem:[%s2 + $0x4d8] sm:$0xff]
  %v382 = vld [vmem:[%s2 + $0x4e0] sm:$0xff]
  %v383 = vld [vmem:[%s2 + $0x4e8] sm:$0xff]
  %v384 = vld [vmem:[%s2 + $0x4f0] sm:$0xff]
  %v385 = vld [vmem:[%s2 + $0x4f8] sm:$0xff]
  %v386 = vld [vmem:[%s2 + $0x500] sm:$0xff]
  %v387 = vld [vmem:[%s2 + $0x508] sm:$0xff]
  %v388 = vld [vmem:[%s2 + $0x510] sm:$0xff]
  %v389 = vld [vmem:[%s2 + $0x518] sm:$0xff]
  %v390 = vld [vmem:[%s2 + $0x520] sm:$0xff]
  %v391 = vld [vmem:[%s2 + $0x528] sm:$0xff]
  %v392 = vld [vmem:[%s2 + $0x530] sm:$0xff]
  %v393 = vld [vmem:[%s2 + $0x538] sm:$0xff]
  %v394 = vld [vmem:[%s2 + $0x540] sm:$0xff]
  %v395 = vld [vmem:[%s2 + $0x548] sm:$0xff]
  %v396 = vld [vmem:[%s2 + $0x550] sm:$0xff]
  %v397 = vld [vmem:[%s2 + $0x558] sm:$0xff]
  %v398 = vld [vmem:[%s2 + $0x560] sm:$0xff]
  %v399 = vld [vmem:[%s2 + $0x568] sm:$0xff]
  %v400 = vld [vmem:[%s2 + $0x570] sm:$0xff]
  %v401 = vld [vmem:[%s2 + $0x578] sm:$0xff]
  %v402 = vld [vmem:[%s2 + $0x580] sm:$0xff]
  %v403 = vld [vmem:[%s2 + $0x588] sm:$0xff]
  %v404 = vld [vmem:[%s2 + $0x590] sm:$0xff]
  %v405 = vld [vmem:[%s2 + $0x598] sm:$0xff]
  %v406 = vld [vmem:[%s2 + $0x5a0] sm:$0xff]
  %v407 = vld [vmem:[%s2 + $0x5a8] sm:$0xff]
  %v408 = vld [vmem:[%s2 + $0x5b0] sm:$0xff]
  %v409 = vld [vmem:[%s2 + $0x5b8] sm:$0xff]
  %v410 = vld [vmem:[%s2 + $0x5c0] sm:$0xff]
  %v411 = vld [vmem:[%s2 + $0x5c8] sm:$0xff]
  %v412 = vld [vmem:[%s2 + $0x5d0] sm:$0xff]
  %v413 = vld [vmem:[%s2 + $0x5d8] sm:$0xff]
  %v414 = vld [vmem:[%s2 + $0x5e0] sm:$0xff]
  %v415 = vld [vmem:[%s2 + $0x5e8] sm:$0xff]
  %v416 = vld [vmem:[%s2 + $0x5f0] sm:$0xff]
  %v417 = vld [vmem:[%s2 + $0x5f8] sm:$0xff]
  %v418 = vld [vmem:[%s2 + $0x600] sm:$0xff]
  %v419 = vld [vmem:[%s2 + $0x608] sm:$0xff]
  %v420 = vld [vmem:[%s2 + $0x610] sm:$0xff]
  %v421 = vld [vmem:[%s2 + $0x618] sm:$0xff]
  %v422 = vld [vmem:[%s2 + $0x620] sm:$0xff]
  %v423 = vld [vmem:[%s2 + $0x628] sm:$0xff]
  %v424 = vld [vmem:[%s2 + $0x630] sm:$0xff]
  %v425 = vld [vmem:[%s2 + $0x638] sm:$0xff]
  %v426 = vld [vmem:[%s2 + $0x640] sm:$0xff]
  %v427 = vld [vmem:[%s2 + $0x648] sm:$0xff]
  %v428 = vld [vmem:[%s2 + $0x650] sm:$0xff]
  %v429 = vld [vmem:[%s2 + $0x658] sm:$0xff]
  %v430 = vld [vmem:[%s2 + $0x660] sm:$0xff]
  %v431 = vld [vmem:[%s2 + $0x668] sm:$0xff]
  %v432 = vld [vmem:[%s2 + $0x670] sm:$0xff]
  %v433 = vld [vmem:[%s2 + $0x678] sm:$0xff]
  %v434 = vld [vmem:[%s2 + $0x680] sm:$0xff]
  %v435 = vld [vmem:[%s2 + $0x688] sm:$0xff]
  %v436 = vld [vmem:[%s2 + $0x690] sm:$0xff]
  %v437 = vld [vmem:[%s2 + $0x698] sm:$0xff]
  %v438 = vld [vmem:[%s2 + $0x6a0] sm:$0xff]
  %v439 = vld [vmem:[%s2 + $0x6a8] sm:$0xff]
  %v440 = vld [vmem:[%s2 + $0x6b0] sm:$0xff]
  %v441 = vld [vmem:[%s2 + $0x6b8] sm:$0xff]
  %v442 = vld [vmem:[%s2 + $0x6c0] sm:$0xff]
  %v443 = vld [vmem:[%s2 + $0x6c8] sm:$0xff]
  %v444 = vld [vmem:[%s2 + $0x6d0] sm:$0xff]
  %v445 = vld [vmem:[%s2 + $0x6d8] sm:$0xff]
  %v446 = vld [vmem:[%s2 + $0x6e0] sm:$0xff]
  %v447 = vld [vmem:[%s2 + $0x6e8] sm:$0xff]
  %v448 = vld [vmem:[%s2 + $0x6f0] sm:$0xff]
  %v449 = vld [vmem:[%s2 + $0x6f8] sm:$0xff]
  %v450 = vld [vmem:[%s2 + $0x700] sm:$0xff]
  %v451 = vld [vmem:[%s2 + $0x708] sm:$0xff]
  %v452 = vld [vmem:[%s2 + $0x710] sm:$0xff]
  %v453 = vld [vmem:[%s2 + $0x718] sm:$0xff]
  %v454 = vld [vmem:[%s2 + $0x720] sm:$0xff]
  %v455 = vld [vmem:[%s2 + $0x728] sm:$0xff]
  %v456 = vld [vmem:[%s2 + $0x730] sm:$0xff]
  %v457 = vld [vmem:[%s2 + $0x738] sm:$0xff]
  %v458 = vld [vmem:[%s2 + $0x740] sm:$0xff]
  %v459 = vld [vmem:[%s2 + $0x748] sm:$0xff]
  %v460 = vld [vmem:[%s2 + $0x750] sm:$0xff]
  %v461 = vld [vmem:[%s2 + $0x758] sm:$0xff]
  %v462 = vld [vmem:[%s2 + $0x760] sm:$0xff]
  %v463 = vld [vmem:[%s2 + $0x768] sm:$0xff]
  %v464 = vld [vmem:[%s2 + $0x770] sm:$0xff]
  %v465 = vld [vmem:[%s2 + $0x778] sm:$0xff]
  %v466 = vld [vmem:[%s2 + $0x780] sm:$0xff]
  %v467 = vld [vmem:[%s2 + $0x788] sm:$0xff]
  %v468 = vld [vmem:[%s2 + $0x790] sm:$0xff]
  %v469 = vld [vmem:[%s2 + $0x798] sm:$0xff]
  %v470 = vld [vmem:[%s2 + $0x7a0] sm:$0xff]
  %v471 = vld [vmem:[%s2 + $0x7a8] sm:$0xff]
  %v472 = vld [vmem:[%s2 + $0x7b0] sm:$0xff]
  %v473 = vld [vmem:[%s2 + $0x7b8] sm:$0xff]
  %v474 = vld [vmem:[%s2 + $0x7c0] sm:$0xff]
  %v475 = vld [vmem:[%s2 + $0x7c8] sm:$0xff]
  %v476 = vld [vmem:[%s2 + $0x7d0] sm:$0xff]
  %v477 = vld [vmem:[%s2 + $0x7d8] sm:$0xff]
  %v478 = vld [vmem:[%s2 + $0x7e0] sm:$0xff]
  %v479 = vld [vmem:[%s2 + $0x7e8] sm:$0xff]
  %v480 = vld [vmem:[%s2 + $0x7f0] sm:$0xff]
  %v481 = vld [vmem:[%s2 + $0x7f8] sm:$0xff]
  %482 = vmatprep.subr.mxu0 %v355
  %483 = vmatpush1.msra.mxu0 %v354
  %484 = vmatprep.subr.mxu0 %v357
  %485 = vmatpush1.msra.mxu0 %v356
  %486 = vmatprep.subr.mxu0 %v359
  %487 = vmatpush1.msra.mxu0 %v358
  %488 = vmatprep.subr.mxu0 %v361
  %489 = vmatpush1.msra.mxu0 %v360
  %490 = vmatprep.subr.mxu0 %v363
  %491 = vmatpush1.msra.mxu0 %v362
  %492 = vmatprep.subr.mxu0 %v365
  %493 = vmatpush1.msra.mxu0 %v364
  %494 = vmatprep.subr.mxu0 %v367
  %495 = vmatpush1.msra.mxu0 %v366
  %496 = vmatprep.subr.mxu0 %v369
  %497 = vmatpush1.msra.mxu0 %v368
  %498 = vmatprep.subr.mxu0 %v371
  %499 = vmatpush1.msra.mxu0 %v370
  %500 = vmatprep.subr.mxu0 %v373
  %501 = vmatpush1.msra.mxu0 %v372
  %502 = vmatprep.subr.mxu0 %v375
  %503 = vmatpush1.msra.mxu0 %v374
  %504 = vmatprep.subr.mxu0 %v377
  %505 = vmatpush1.msra.mxu0 %v376
  %506 = vmatprep.subr.mxu0 %v379
  %507 = vmatpush1.msra.mxu0 %v378
  %508 = vmatprep.subr.mxu0 %v381
  %509 = vmatpush1.msra.mxu0 %v380
  %510 = vmatprep.subr.mxu0 %v383
  %511 = vmatpush1.msra.mxu0 %v382
  %512 = vmatprep.subr.mxu0 %v385
  %513 = vmatpush1.msra.mxu0 %v384
  %514 = vmatprep.subr.mxu0 %v387
  %515 = vmatpush1.msra.mxu0 %v386
  %516 = vmatprep.subr.mxu0 %v389
  %517 = vmatpush1.msra.mxu0 %v388
  %518 = vmatprep.subr.mxu0 %v391
  %519 = vmatpush1.msra.mxu0 %v390
  %520 = vmatprep.subr.mxu0 %v393
  %521 = vmatpush1.msra.mxu0 %v392
  %522 = vmatprep.subr.mxu0 %v395
  %523 = vmatpush1.msra.mxu0 %v394
  %524 = vmatprep.subr.mxu0 %v397
  %525 = vmatpush1.msra.mxu0 %v396
  %526 = vmatprep.subr.mxu0 %v399
  %527 = vmatpush1.msra.mxu0 %v398
  %528 = vmatprep.subr.mxu0 %v401
  %529 = vmatpush1.msra.mxu0 %v400
  %530 = vmatprep.subr.mxu0 %v403
  %531 = vmatpush1.msra.mxu0 %v402
  %532 = vmatprep.subr.mxu0 %v405
  %533 = vmatpush1.msra.mxu0 %v404
  %534 = vmatprep.subr.mxu0 %v407
  %535 = vmatpush1.msra.mxu0 %v406
  %536 = vmatprep.subr.mxu0 %v409
  %537 = vmatpush1.msra.mxu0 %v408
  %538 = vmatprep.subr.mxu0 %v411
  %539 = vmatpush1.msra.mxu0 %v410
  %540 = vmatprep.subr.mxu0 %v413
  %541 = vmatpush1.msra.mxu0 %v412
  %542 = vmatprep.subr.mxu0 %v415
  %543 = vmatpush1.msra.mxu0 %v414
  %544 = vmatprep.subr.mxu0 %v417
  %545 = vmatpush1.msra.mxu0 %v416
  %546 = vmatprep.mubr.f32.mxu0 %v347
  %547 = vmatmul.mubr.f32.gmra.mrb[0].mxu0 %v346
  %v548 = vpop.f32.mrb[0].mxu0
  %v549 = vadd.f32 0.0, %v548
  %v550 = vpop.f32.mrb[0].mxu0
  %v551 = vadd.f32 0.0, %v550
  %552 = vmatprep.mubr.f32.mxu0 %v351
  %553 = vmatmul.mubr.f32.gmra.mrb[0].mxu0 %v350
  %v554 = vpop.f32.mrb[0].mxu0
  %v555 = vadd.f32 0.0, %v554
  %v556 = vpop.f32.mrb[0].mxu0
  %v557 = vadd.f32 0.0, %v556
  %558 = vdwg.mxu0
  %559 = vmatprep.subr.mxu0 %v419
  %560 = vmatpush1.msra.mxu0 %v418
  %561 = vmatprep.subr.mxu0 %v421
  %562 = vmatpush1.msra.mxu0 %v420
  %563 = vmatprep.subr.mxu0 %v423
  %564 = vmatpush1.msra.mxu0 %v422
  %565 = vmatprep.subr.mxu0 %v425
  %566 = vmatpush1.msra.mxu0 %v424
  %567 = vmatprep.subr.mxu0 %v427
  %568 = vmatpush1.msra.mxu0 %v426
  %569 = vmatprep.subr.mxu0 %v429
  %570 = vmatpush1.msra.mxu0 %v428
  %571 = vmatprep.subr.mxu0 %v431
  %572 = vmatpush1.msra.mxu0 %v430
  %573 = vmatprep.subr.mxu0 %v433
  %574 = vmatpush1.msra.mxu0 %v432
  %575 = vmatprep.subr.mxu0 %v435
  %576 = vmatpush1.msra.mxu0 %v434
  %577 = vmatprep.subr.mxu0 %v437
  %578 = vmatpush1.msra.mxu0 %v436
  %579 = vmatprep.subr.mxu0 %v439
  %580 = vmatpush1.msra.mxu0 %v438
  %581 = vmatprep.subr.mxu0 %v441
  %582 = vmatpush1.msra.mxu0 %v440
  %583 = vmatprep.subr.mxu0 %v443
  %584 = vmatpush1.msra.mxu0 %v442
  %585 = vmatprep.subr.mxu0 %v445
  %586 = vmatpush1.msra.mxu0 %v444
  %587 = vmatprep.subr.mxu0 %v447
  %588 = vmatpush1.msra.mxu0 %v446
  %589 = vmatprep.subr.mxu0 %v449
  %590 = vmatpush1.msra.mxu0 %v448
  %591 = vmatprep.subr.mxu0 %v451
  %592 = vmatpush1.msra.mxu0 %v450
  %593 = vmatprep.subr.mxu0 %v453
  %594 = vmatpush1.msra.mxu0 %v452
  %595 = vmatprep.subr.mxu0 %v455
  %596 = vmatpush1.msra.mxu0 %v454
  %597 = vmatprep.subr.mxu0 %v457
  %598 = vmatpush1.msra.mxu0 %v456
  %599 = vmatprep.subr.mxu0 %v459
  %600 = vmatpush1.msra.mxu0 %v458
  %601 = vmatprep.subr.mxu0 %v461
  %602 = vmatpush1.msra.mxu0 %v460
  %603 = vmatprep.subr.mxu0 %v463
  %604 = vmatpush1.msra.mxu0 %v462
  %605 = vmatprep.subr.mxu0 %v465
  %606 = vmatpush1.msra.mxu0 %v464
  %607 = vmatprep.subr.mxu0 %v467
  %608 = vmatpush1.msra.mxu0 %v466
  %609 = vmatprep.subr.mxu0 %v469
  %610 = vmatpush1.msra.mxu0 %v468
  %611 = vmatprep.subr.mxu0 %v471
  %612 = vmatpush1.msra.mxu0 %v470
  %613 = vmatprep.subr.mxu0 %v473
  %614 = vmatpush1.msra.mxu0 %v472
  %615 = vmatprep.subr.mxu0 %v475
  %616 = vmatpush1.msra.mxu0 %v474
  %617 = vmatprep.subr.mxu0 %v477
  %618 = vmatpush1.msra.mxu0 %v476
  %619 = vmatprep.subr.mxu0 %v479
  %620 = vmatpush1.msra.mxu0 %v478
  %621 = vmatprep.subr.mxu0 %v481
  %622 = vmatpush1.msra.mxu0 %v480
  %623 = vmatprep.mubr.f32.mxu0 %v349
  %624 = vmatmul.mubr.f32.gmra.mrb[0].mxu0 %v348
  %v625 = vpop.f32.mrb[0].mxu0
  %v626 = vadd.f32 %v549, %v625
  %v627 = vpop.f32.mrb[0].mxu0
  %v628 = vadd.f32 %v551, %v627
  %629 = vmatprep.mubr.f32.mxu0 %v353
  %630 = vmatmul.mubr.f32.gmra.mrb[0].mxu0 %v352
  %v631 = vpop.f32.mrb[0].mxu0
  %v632 = vadd.f32 %v555, %v631
  %v633 = vpop.f32.mrb[0].mxu0
  %v634 = vadd.f32 %v557, %v633
  %635 = vdwg.mxu0
  %636 = vmatprep.subr.mxu0 %v219
  %637 = vmatpush1.msra.mxu0 %v218
  %638 = vmatprep.subr.mxu0 %v221
  %639 = vmatpush1.msra.mxu0 %v220
  %640 = vmatprep.subr.mxu0 %v223
  %641 = vmatpush1.msra.mxu0 %v222
  %642 = vmatprep.subr.mxu0 %v225
  %643 = vmatpush1.msra.mxu0 %v224
  %644 = vmatprep.subr.mxu0 %v227
  %645 = vmatpush1.msra.mxu0 %v226
  %646 = vmatprep.subr.mxu0 %v229
  %647 = vmatpush1.msra.mxu0 %v228
  %648 = vmatprep.subr.mxu0 %v231
  %649 = vmatpush1.msra.mxu0 %v230
  %650 = vmatprep.subr.mxu0 %v233
  %651 = vmatpush1.msra.mxu0 %v232
  %652 = vmatprep.subr.mxu0 %v235
  %653 = vmatpush1.msra.mxu0 %v234
  %654 = vmatprep.subr.mxu0 %v237
  %655 = vmatpush1.msra.mxu0 %v236
  %656 = vmatprep.subr.mxu0 %v239
  %657 = vmatpush1.msra.mxu0 %v238
  %658 = vmatprep.subr.mxu0 %v241
  %659 = vmatpush1.msra.mxu0 %v240
  %660 = vmatprep.subr.mxu0 %v243
  %661 = vmatpush1.msra.mxu0 %v242
  %662 = vmatprep.subr.mxu0 %v245
  %663 = vmatpush1.msra.mxu0 %v244
  %664 = vmatprep.subr.mxu0 %v247
  %665 = vmatpush1.msra.mxu0 %v246
  %666 = vmatprep.subr.mxu0 %v249
  %667 = vmatpush1.msra.mxu0 %v248
  %668 = vmatprep.subr.mxu0 %v251
  %669 = vmatpush1.msra.mxu0 %v250
  %670 = vmatprep.subr.mxu0 %v253
  %671 = vmatpush1.msra.mxu0 %v252
  %672 = vmatprep.subr.mxu0 %v255
  %673 = vmatpush1.msra.mxu0 %v254
  %674 = vmatprep.subr.mxu0 %v257
  %675 = vmatpush1.msra.mxu0 %v256
  %676 = vmatprep.subr.mxu0 %v259
  %677 = vmatpush1.msra.mxu0 %v258
  %678 = vmatprep.subr.mxu0 %v261
  %679 = vmatpush1.msra.mxu0 %v260
  %680 = vmatprep.subr.mxu0 %v263
  %681 = vmatpush1.msra.mxu0 %v262
  %682 = vmatprep.subr.mxu0 %v265
  %683 = vmatpush1.msra.mxu0 %v264
  %684 = vmatprep.subr.mxu0 %v267
  %685 = vmatpush1.msra.mxu0 %v266
  %686 = vmatprep.subr.mxu0 %v269
  %687 = vmatpush1.msra.mxu0 %v268
  %688 = vmatprep.subr.mxu0 %v271
  %689 = vmatpush1.msra.mxu0 %v270
  %690 = vmatprep.subr.mxu0 %v273
  %691 = vmatpush1.msra.mxu0 %v272
  %692 = vmatprep.subr.mxu0 %v275
  %693 = vmatpush1.msra.mxu0 %v274
  %694 = vmatprep.subr.mxu0 %v277
  %695 = vmatpush1.msra.mxu0 %v276
  %696 = vmatprep.subr.mxu0 %v279
  %697 = vmatpush1.msra.mxu0 %v278
  %698 = vmatprep.subr.mxu0 %v281
  %699 = vmatpush1.msra.mxu0 %v280
  %700 = vmatprep.mubr.f32.mxu0 %v133
  %701 = vmatmul.mubr.f32.gmra.mrb[0].mxu0 %v131
  %v702 = vpop.f32.mrb[0].mxu0
  %v703 = vadd.f32 %v626, %v702
  %v704 = vpop.f32.mrb[0].mxu0
  %v705 = vadd.f32 %v628, %v704
  %706 = vmatprep.mubr.f32.mxu0 %v139
  %707 = vmatmul.mubr.f32.gmra.mrb[0].mxu0 %v137
  %v708 = vpop.f32.mrb[0].mxu0
  %v709 = vadd.f32 %v632, %v708
  %v710 = vpop.f32.mrb[0].mxu0
  %v711 = vadd.f32 %v634, %v710
  %712 = vdwg.mxu0
  %713 = vmatprep.subr.mxu0 %v283
  %714 = vmatpush1.msra.mxu0 %v282
  %715 = vmatprep.subr.mxu0 %v285
  %716 = vmatpush1.msra.mxu0 %v284
  %717 = vmatprep.subr.mxu0 %v287
  %718 = vmatpush1.msra.mxu0 %v286
  %719 = vmatprep.subr.mxu0 %v289
  %720 = vmatpush1.msra.mxu0 %v288
  %721 = vmatprep.subr.mxu0 %v291
  %722 = vmatpush1.msra.mxu0 %v290
  %723 = vmatprep.subr.mxu0 %v293
  %724 = vmatpush1.msra.mxu0 %v292
  %725 = vmatprep.subr.mxu0 %v295
  %726 = vmatpush1.msra.mxu0 %v294
  %727 = vmatprep.subr.mxu0 %v297
  %728 = vmatpush1.msra.mxu0 %v296
  %729 = vmatprep.subr.mxu0 %v299
  %730 = vmatpush1.msra.mxu0 %v298
  %731 = vmatprep.subr.mxu0 %v301
  %732 = vmatpush1.msra.mxu0 %v300
  %733 = vmatprep.subr.mxu0 %v303
  %734 = vmatpush1.msra.mxu0 %v302
  %735 = vmatprep.subr.mxu0 %v305
  %736 = vmatpush1.msra.mxu0 %v304
  %737 = vmatprep.subr.mxu0 %v307
  %738 = vmatpush1.msra.mxu0 %v306
  %739 = vmatprep.subr.mxu0 %v309
  %740 = vmatpush1.msra.mxu0 %v308
  %741 = vmatprep.subr.mxu0 %v311
  %742 = vmatpush1.msra.mxu0 %v310
  %743 = vmatprep.subr.mxu0 %v313
  %744 = vmatpush1.msra.mxu0 %v312
  %745 = vmatprep.subr.mxu0 %v315
  %746 = vmatpush1.msra.mxu0 %v314
  %747 = vmatprep.subr.mxu0 %v317
  %748 = vmatpush1.msra.mxu0 %v316
  %749 = vmatprep.subr.mxu0 %v319
  %750 = vmatpush1.msra.mxu0 %v318
  %751 = vmatprep.subr.mxu0 %v321
  %752 = vmatpush1.msra.mxu0 %v320
  %753 = vmatprep.subr.mxu0 %v323
  %754 = vmatpush1.msra.mxu0 %v322
  %755 = vmatprep.subr.mxu0 %v325
  %756 = vmatpush1.msra.mxu0 %v324
  %757 = vmatprep.subr.mxu0 %v327
  %758 = vmatpush1.msra.mxu0 %v326
  %759 = vmatprep.subr.mxu0 %v329
  %760 = vmatpush1.msra.mxu0 %v328
  %761 = vmatprep.subr.mxu0 %v331
  %762 = vmatpush1.msra.mxu0 %v330
  %763 = vmatprep.subr.mxu0 %v333
  %764 = vmatpush1.msra.mxu0 %v332
  %765 = vmatprep.subr.mxu0 %v335
  %766 = vmatpush1.msra.mxu0 %v334
  %767 = vmatprep.subr.mxu0 %v337
  %768 = vmatpush1.msra.mxu0 %v336
  %769 = vmatprep.subr.mxu0 %v339
  %770 = vmatpush1.msra.mxu0 %v338
  %771 = vmatprep.subr.mxu0 %v341
  %772 = vmatpush1.msra.mxu0 %v340
  %773 = vmatprep.subr.mxu0 %v343
  %774 = vmatpush1.msra.mxu0 %v342
  %775 = vmatprep.subr.mxu0 %v345
  %776 = vmatpush1.msra.mxu0 %v344
  %777 = vmatprep.mubr.f32.mxu0 %v210
  %778 = vmatmul.mubr.f32.gmra.mrb[0].mxu0 %v208
  %v779 = vpop.f32.mrb[0].mxu0
  %v780 = vadd.f32 %v703, %v779
  %v781 = vpop.f32.mrb[0].mxu0
  %v782 = vadd.f32 %v705, %v781
  %783 = vmatprep.mubr.f32.mxu0 %v216
  %784 = vmatmul.mubr.f32.gmra.mrb[0].mxu0 %v214
  %v785 = vpop.f32.mrb[0].mxu0
  %v786 = vadd.f32 %v709, %v785
  %v787 = vpop.f32.mrb[0].mxu0
  %v788 = vadd.f32 %v711, %v787
  %789 = vdwg.mxu0
  %v790 = vld [vmem:[%s3] sm:$0x3]
  %v792 = vlaneseq
  %v793 = vshrl.u32 %v792, 7
  %v794 = vsub.s32 0, %v793
  %v795 = vrot.slane %v790, %v794
  %v796 = vlaneseq
  %v797 = vshrl.u32 %v796, 7
  %v798 = vsub.s32 1, %v797
  %v799 = vrot.slane %v790, %v798
  %v802 = vadd.f32 %v780, %v795
  %v803 = vadd.f32 %v782, %v799
  %v804 = vadd.f32 %v786, %v795
  %v805 = vadd.f32 %v788, %v799
  %vm806 = vcmp.gt.f32.partialorder %v802, 0.0
  %vm807 = vcmp.gt.f32.partialorder %v803, 0.0
  %vm808 = vcmp.gt.f32.partialorder %v804, 0.0
  %vm809 = vcmp.gt.f32.partialorder %v805, 0.0
  %v810 = vmul.f32 %v802, 0.01
  %v811 = vmul.f32 %v803, 0.01
  %v812 = vmul.f32 %v804, 0.01
  %v813 = vmul.f32 %v805, 0.01
  %v814 = vsel %vm806, %v802, %v810
  %v815 = vsel %vm807, %v803, %v811
  %v816 = vsel %vm808, %v804, %v812
  %v817 = vsel %vm809, %v805, %v813
  %v818 = vld [vmem:[%s4] sm:$0xff]
  %v819 = vld [vmem:[%s4 + $0x8] sm:$0xff]
  %v820 = vld [vmem:[%s4 + $0x10] sm:$0xff]
  %v821 = vld [vmem:[%s4 + $0x18] sm:$0xff]
  %v822 = vld [vmem:[%s4 + $0x20] sm:$0xff]
  %v823 = vld [vmem:[%s4 + $0x28] sm:$0xff]
  %v824 = vld [vmem:[%s4 + $0x30] sm:$0xff]
  %v825 = vld [vmem:[%s4 + $0x38] sm:$0xff]
  %v826 = vld [vmem:[%s4 + $0x40] sm:$0xff]
  %v827 = vld [vmem:[%s4 + $0x48] sm:$0xff]
  %v828 = vld [vmem:[%s4 + $0x50] sm:$0xff]
  %v829 = vld [vmem:[%s4 + $0x58] sm:$0xff]
  %v830 = vld [vmem:[%s4 + $0x60] sm:$0xff]
  %v831 = vld [vmem:[%s4 + $0x68] sm:$0xff]
  %v832 = vld [vmem:[%s4 + $0x70] sm:$0xff]
  %v833 = vld [vmem:[%s4 + $0x78] sm:$0xff]
  %v834 = vld [vmem:[%s4 + $0x80] sm:$0xff]
  %v835 = vld [vmem:[%s4 + $0x88] sm:$0xff]
  %v836 = vld [vmem:[%s4 + $0x90] sm:$0xff]
  %v837 = vld [vmem:[%s4 + $0x98] sm:$0xff]
  %v838 = vld [vmem:[%s4 + $0xa0] sm:$0xff]
  %v839 = vld [vmem:[%s4 + $0xa8] sm:$0xff]
  %v840 = vld [vmem:[%s4 + $0xb0] sm:$0xff]
  %v841 = vld [vmem:[%s4 + $0xb8] sm:$0xff]
  %v842 = vld [vmem:[%s4 + $0xc0] sm:$0xff]
  %v843 = vld [vmem:[%s4 + $0xc8] sm:$0xff]
  %v844 = vld [vmem:[%s4 + $0xd0] sm:$0xff]
  %v845 = vld [vmem:[%s4 + $0xd8] sm:$0xff]
  %v846 = vld [vmem:[%s4 + $0xe0] sm:$0xff]
  %v847 = vld [vmem:[%s4 + $0xe8] sm:$0xff]
  %v848 = vld [vmem:[%s4 + $0xf0] sm:$0xff]
  %v849 = vld [vmem:[%s4 + $0xf8] sm:$0xff]
  %v850 = vld [vmem:[%s5] sm:$0x1]
  %v852 = vlaneseq
  %v853 = vshrl.u32 %v852, 7
  %v854 = vsub.s32 0, %v853
  %v855 = vrot.slane %v850, %v854
  %857 = vmatprep.subr.mxu0 0.0
  %858 = vmatpush1.msra.mxu0 %v818
  %859 = vmatprep.subr.mxu0 0.0
  %860 = vmatpush1.msra.mxu0 %v819
  %861 = vmatprep.subr.mxu0 0.0
  %862 = vmatpush1.msra.mxu0 %v820
  %863 = vmatprep.subr.mxu0 0.0
  %864 = vmatpush1.msra.mxu0 %v821
  %865 = vmatprep.subr.mxu0 0.0
  %866 = vmatpush1.msra.mxu0 %v822
  %867 = vmatprep.subr.mxu0 0.0
  %868 = vmatpush1.msra.mxu0 %v823
  %869 = vmatprep.subr.mxu0 0.0
  %870 = vmatpush1.msra.mxu0 %v824
  %871 = vmatprep.subr.mxu0 0.0
  %872 = vmatpush1.msra.mxu0 %v825
  %873 = vmatprep.subr.mxu0 0.0
  %874 = vmatpush1.msra.mxu0 %v826
  %875 = vmatprep.subr.mxu0 0.0
  %876 = vmatpush1.msra.mxu0 %v827
  %877 = vmatprep.subr.mxu0 0.0
  %878 = vmatpush1.msra.mxu0 %v828
  %879 = vmatprep.subr.mxu0 0.0
  %880 = vmatpush1.msra.mxu0 %v829
  %881 = vmatprep.subr.mxu0 0.0
  %882 = vmatpush1.msra.mxu0 %v830
  %883 = vmatprep.subr.mxu0 0.0
  %884 = vmatpush1.msra.mxu0 %v831
  %885 = vmatprep.subr.mxu0 0.0
  %886 = vmatpush1.msra.mxu0 %v832
  %887 = vmatprep.subr.mxu0 0.0
  %888 = vmatpush1.msra.mxu0 %v833
  %889 = vmatprep.subr.mxu0 0.0
  %890 = vmatpush1.msra.mxu0 %v834
  %891 = vmatprep.subr.mxu0 0.0
  %892 = vmatpush1.msra.mxu0 %v835
  %893 = vmatprep.subr.mxu0 0.0
  %894 = vmatpush1.msra.mxu0 %v836
  %895 = vmatprep.subr.mxu0 0.0
  %896 = vmatpush1.msra.mxu0 %v837
  %897 = vmatprep.subr.mxu0 0.0
  %898 = vmatpush1.msra.mxu0 %v838
  %899 = vmatprep.subr.mxu0 0.0
  %900 = vmatpush1.msra.mxu0 %v839
  %901 = vmatprep.subr.mxu0 0.0
  %902 = vmatpush1.msra.mxu0 %v840
  %903 = vmatprep.subr.mxu0 0.0
  %904 = vmatpush1.msra.mxu0 %v841
  %905 = vmatprep.subr.mxu0 0.0
  %906 = vmatpush1.msra.mxu0 %v842
  %907 = vmatprep.subr.mxu0 0.0
  %908 = vmatpush1.msra.mxu0 %v843
  %909 = vmatprep.subr.mxu0 0.0
  %910 = vmatpush1.msra.mxu0 %v844
  %911 = vmatprep.subr.mxu0 0.0
  %912 = vmatpush1.msra.mxu0 %v845
  %913 = vmatprep.subr.mxu0 0.0
  %914 = vmatpush1.msra.mxu0 %v846
  %915 = vmatprep.subr.mxu0 0.0
  %916 = vmatpush1.msra.mxu0 %v847
  %917 = vmatprep.subr.mxu0 0.0
  %918 = vmatpush1.msra.mxu0 %v848
  %919 = vmatprep.subr.mxu0 0.0
  %920 = vmatpush1.msra.mxu0 %v849
  %921 = vmatprep.mubr.f32.mxu0 %v815
  %922 = vmatmul.mubr.f32.gmra.mrb[0].mxu0 %v814
  %v923 = vpop.f32.mrb[0].mxu0
  %v924 = vadd.f32 %v855, %v923
  %v925 = vpop.f32.mrb[0].mxu0
  %926 = vmatprep.mubr.f32.mxu0 %v817
  %927 = vmatmul.mubr.f32.gmra.mrb[0].mxu0 %v816
  %v928 = vpop.f32.mrb[0].mxu0
  %v929 = vadd.f32 %v855, %v928
  %v930 = vpop.f32.mrb[0].mxu0
  %931 = vdwg.mxu0
  %v932 = vld [vmem:[%s7] sm:$0xff]
  %v933 = vld [vmem:[%s7 + $0x8] sm:$0xff]
  %v934 = vld [vmem:[%s6] sm:$0xff]
  %v935 = vld [vmem:[%s6 + $0x8] sm:$0xff]
  %vm936 = vcmask 130048
  %v938 = vsel %vm936, %v934, 0
  %v941 = vsel %vm936, %v935, 0
  %943 = vmatprep.subr.mxu0 0.0
  %944 = vmatpush1.msra.mxu0 %v924
  %945 = vmatprep.subr.mxu0 0.0
  %946 = vmatpush1.msra.mxu0 %v929
  %947 = vmatprep.subr.mxu0 0.0
  %948 = vmatpush1.msra.mxu0 0.0
  %949 = vmatprep.subr.mxu0 0.0
  %950 = vmatpush1.msra.mxu0 0.0
  %951 = vmatprep.subr.mxu0 0.0
  %952 = vmatpush1.msra.mxu0 0.0
  %953 = vmatprep.subr.mxu0 0.0
  %954 = vmatpush1.msra.mxu0 0.0
  %955 = vmatprep.subr.mxu0 0.0
  %956 = vmatpush1.msra.mxu0 0.0
  %957 = vmatprep.subr.mxu0 0.0
  %958 = vmatpush1.msra.mxu0 0.0
  %959 = vmatprep.subr.mxu0 0.0
  %960 = vmatpush1.msra.mxu0 0.0
  %961 = vmatprep.subr.mxu0 0.0
  %962 = vmatpush1.msra.mxu0 0.0
  %963 = vmatprep.subr.mxu0 0.0
  %964 = vmatpush1.msra.mxu0 0.0
  %965 = vmatprep.subr.mxu0 0.0
  %966 = vmatpush1.msra.mxu0 0.0
  %967 = vmatprep.subr.mxu0 0.0
  %968 = vmatpush1.msra.mxu0 0.0
  %969 = vmatprep.subr.mxu0 0.0
  %970 = vmatpush1.msra.mxu0 0.0
  %971 = vmatprep.subr.mxu0 0.0
  %972 = vmatpush1.msra.mxu0 0.0
  %973 = vmatprep.subr.mxu0 0.0
  %974 = vmatpush1.msra.mxu0 0.0
  %975 = vmatprep.subr.mxu0 0.0
  %976 = vmatpush1.msra.mxu0 0.0
  %977 = vmatprep.subr.mxu0 0.0
  %978 = vmatpush1.msra.mxu0 0.0
  %979 = vmatprep.subr.mxu0 0.0
  %980 = vmatpush1.msra.mxu0 0.0
  %981 = vmatprep.subr.mxu0 0.0
  %982 = vmatpush1.msra.mxu0 0.0
  %983 = vmatprep.subr.mxu0 0.0
  %984 = vmatpush1.msra.mxu0 0.0
  %985 = vmatprep.subr.mxu0 0.0
  %986 = vmatpush1.msra.mxu0 0.0
  %987 = vmatprep.subr.mxu0 0.0
  %988 = vmatpush1.msra.mxu0 0.0
  %989 = vmatprep.subr.mxu0 0.0
  %990 = vmatpush1.msra.mxu0 0.0
  %991 = vmatprep.subr.mxu0 0.0
  %992 = vmatpush1.msra.mxu0 0.0
  %993 = vmatprep.subr.mxu0 0.0
  %994 = vmatpush1.msra.mxu0 0.0
  %995 = vmatprep.subr.mxu0 0.0
  %996 = vmatpush1.msra.mxu0 0.0
  %997 = vmatprep.subr.mxu0 0.0
  %998 = vmatpush1.msra.mxu0 0.0
  %999 = vmatprep.subr.mxu0 0.0
  %1000 = vmatpush1.msra.mxu0 0.0
  %1001 = vmatprep.subr.mxu0 0.0
  %1002 = vmatpush1.msra.mxu0 0.0
  %1003 = vmatprep.subr.mxu0 0.0
  %1004 = vmatpush1.msra.mxu0 0.0
  %1005 = vmatprep.subr.mxu0 0.0
  %1006 = vmatpush1.msra.mxu0 0.0
  %1007 = vmatprep.mubr.f32.mxu0 0.0
  %1008 = vmatmul.mubr.f32.gmra.mrb[0].mxu0 %v938
  %v1009 = vpop.f32.mrb[0].mxu0
  %v1010 = vadd.f32 0.0, %v1009
  %v1011 = vpop.f32.mrb[0].mxu0
  %1012 = vmatprep.mubr.f32.mxu0 0.0
  %1013 = vmatmul.mubr.f32.gmra.mrb[0].mxu0 %v941
  %v1014 = vpop.f32.mrb[0].mxu0
  %v1015 = vadd.f32 0.0, %v1014
  %v1016 = vpop.f32.mrb[0].mxu0
  %1017 = vdwg.mxu0
  %v1018 = vld [vmem:[%s8] sm:$0xff]
  %v1019 = vld [vmem:[%s8 + $0x8] sm:$0xff]
  %v1021 = vsel %vm936, %v932, 0
  %v1024 = vsel %vm936, %v933, 0
  %1026 = vmatprep.subr.mxu0 0.0
  %1027 = vmatpush1.msra.mxu0 %v1010
  %1028 = vmatprep.subr.mxu0 0.0
  %1029 = vmatpush1.msra.mxu0 %v1015
  %1030 = vmatprep.subr.mxu0 0.0
  %1031 = vmatpush1.msra.mxu0 0.0
  %1032 = vmatprep.subr.mxu0 0.0
  %1033 = vmatpush1.msra.mxu0 0.0
  %1034 = vmatprep.subr.mxu0 0.0
  %1035 = vmatpush1.msra.mxu0 0.0
  %1036 = vmatprep.subr.mxu0 0.0
  %1037 = vmatpush1.msra.mxu0 0.0
  %1038 = vmatprep.subr.mxu0 0.0
  %1039 = vmatpush1.msra.mxu0 0.0
  %1040 = vmatprep.subr.mxu0 0.0
  %1041 = vmatpush1.msra.mxu0 0.0
  %1042 = vmatprep.subr.mxu0 0.0
  %1043 = vmatpush1.msra.mxu0 0.0
  %1044 = vmatprep.subr.mxu0 0.0
  %1045 = vmatpush1.msra.mxu0 0.0
  %1046 = vmatprep.subr.mxu0 0.0
  %1047 = vmatpush1.msra.mxu0 0.0
  %1048 = vmatprep.subr.mxu0 0.0
  %1049 = vmatpush1.msra.mxu0 0.0
  %1050 = vmatprep.subr.mxu0 0.0
  %1051 = vmatpush1.msra.mxu0 0.0
  %1052 = vmatprep.subr.mxu0 0.0
  %1053 = vmatpush1.msra.mxu0 0.0
  %1054 = vmatprep.subr.mxu0 0.0
  %1055 = vmatpush1.msra.mxu0 0.0
  %1056 = vmatprep.subr.mxu0 0.0
  %1057 = vmatpush1.msra.mxu0 0.0
  %1058 = vmatprep.subr.mxu0 0.0
  %1059 = vmatpush1.msra.mxu0 0.0
  %1060 = vmatprep.subr.mxu0 0.0
  %1061 = vmatpush1.msra.mxu0 0.0
  %1062 = vmatprep.subr.mxu0 0.0
  %1063 = vmatpush1.msra.mxu0 0.0
  %1064 = vmatprep.subr.mxu0 0.0
  %1065 = vmatpush1.msra.mxu0 0.0
  %1066 = vmatprep.subr.mxu0 0.0
  %1067 = vmatpush1.msra.mxu0 0.0
  %1068 = vmatprep.subr.mxu0 0.0
  %1069 = vmatpush1.msra.mxu0 0.0
  %1070 = vmatprep.subr.mxu0 0.0
  %1071 = vmatpush1.msra.mxu0 0.0
  %1072 = vmatprep.subr.mxu0 0.0
  %1073 = vmatpush1.msra.mxu0 0.0
  %1074 = vmatprep.subr.mxu0 0.0
  %1075 = vmatpush1.msra.mxu0 0.0
  %1076 = vmatprep.subr.mxu0 0.0
  %1077 = vmatpush1.msra.mxu0 0.0
  %1078 = vmatprep.subr.mxu0 0.0
  %1079 = vmatpush1.msra.mxu0 0.0
  %1080 = vmatprep.subr.mxu0 0.0
  %1081 = vmatpush1.msra.mxu0 0.0
  %1082 = vmatprep.subr.mxu0 0.0
  %1083 = vmatpush1.msra.mxu0 0.0
  %1084 = vmatprep.subr.mxu0 0.0
  %1085 = vmatpush1.msra.mxu0 0.0
  %1086 = vmatprep.subr.mxu0 0.0
  %1087 = vmatpush1.msra.mxu0 0.0
  %1088 = vmatprep.subr.mxu0 0.0
  %1089 = vmatpush1.msra.mxu0 0.0
  %1090 = vmatprep.mubr.f32.mxu0 0.0
  %1091 = vmatmul.mubr.f32.gmra.mrb[0].mxu0 %v1021
  %v1092 = vpop.f32.mrb[0].mxu0
  %v1093 = vadd.f32 %v1018, %v1092
  %v1094 = vpop.f32.mrb[0].mxu0
  %1095 = vmatprep.mubr.f32.mxu0 0.0
  %1096 = vmatmul.mubr.f32.gmra.mrb[0].mxu0 %v1024
  %v1097 = vpop.f32.mrb[0].mxu0
  %v1098 = vadd.f32 %v1019, %v1097
  %v1099 = vpop.f32.mrb[0].mxu0
  %1100 = vdwg.mxu0
  %v1101 = vld [vmem:[%s10] sm:$0xff]
  %v1102 = vld [vmem:[%s10 + $0x8] sm:$0xff]
  %v1104 = vsel %vm936, %v1093, 0
  %v1107 = vsel %vm936, %v1098, 0
  %1109 = vmatprep.subr.mxu0 0.0
  %1110 = vmatpush1.msra.mxu0 %v38
  %1111 = vmatprep.subr.mxu0 0.0
  %1112 = vmatpush1.msra.mxu0 %v39
  %1113 = vmatprep.subr.mxu0 0.0
  %1114 = vmatpush1.msra.mxu0 0.0
  %1115 = vmatprep.subr.mxu0 0.0
  %1116 = vmatpush1.msra.mxu0 0.0
  %1117 = vmatprep.subr.mxu0 0.0
  %1118 = vmatpush1.msra.mxu0 0.0
  %1119 = vmatprep.subr.mxu0 0.0
  %1120 = vmatpush1.msra.mxu0 0.0
  %1121 = vmatprep.subr.mxu0 0.0
  %1122 = vmatpush1.msra.mxu0 0.0
  %1123 = vmatprep.subr.mxu0 0.0
  %1124 = vmatpush1.msra.mxu0 0.0
  %1125 = vmatprep.subr.mxu0 0.0
  %1126 = vmatpush1.msra.mxu0 0.0
  %1127 = vmatprep.subr.mxu0 0.0
  %1128 = vmatpush1.msra.mxu0 0.0
  %1129 = vmatprep.subr.mxu0 0.0
  %1130 = vmatpush1.msra.mxu0 0.0
  %1131 = vmatprep.subr.mxu0 0.0
  %1132 = vmatpush1.msra.mxu0 0.0
  %1133 = vmatprep.subr.mxu0 0.0
  %1134 = vmatpush1.msra.mxu0 0.0
  %1135 = vmatprep.subr.mxu0 0.0
  %1136 = vmatpush1.msra.mxu0 0.0
  %1137 = vmatprep.subr.mxu0 0.0
  %1138 = vmatpush1.msra.mxu0 0.0
  %1139 = vmatprep.subr.mxu0 0.0
  %1140 = vmatpush1.msra.mxu0 0.0
  %1141 = vmatprep.subr.mxu0 0.0
  %1142 = vmatpush1.msra.mxu0 0.0
  %1143 = vmatprep.subr.mxu0 0.0
  %1144 = vmatpush1.msra.mxu0 0.0
  %1145 = vmatprep.subr.mxu0 0.0
  %1146 = vmatpush1.msra.mxu0 0.0
  %1147 = vmatprep.subr.mxu0 0.0
  %1148 = vmatpush1.msra.mxu0 0.0
  %1149 = vmatprep.subr.mxu0 0.0
  %1150 = vmatpush1.msra.mxu0 0.0
  %1151 = vmatprep.subr.mxu0 0.0
  %1152 = vmatpush1.msra.mxu0 0.0
  %1153 = vmatprep.subr.mxu0 0.0
  %1154 = vmatpush1.msra.mxu0 0.0
  %1155 = vmatprep.subr.mxu0 0.0
  %1156 = vmatpush1.msra.mxu0 0.0
  %1157 = vmatprep.subr.mxu0 0.0
  %1158 = vmatpush1.msra.mxu0 0.0
  %1159 = vmatprep.subr.mxu0 0.0
  %1160 = vmatpush1.msra.mxu0 0.0
  %1161 = vmatprep.subr.mxu0 0.0
  %1162 = vmatpush1.msra.mxu0 0.0
  %1163 = vmatprep.subr.mxu0 0.0
  %1164 = vmatpush1.msra.mxu0 0.0
  %1165 = vmatprep.subr.mxu0 0.0
  %1166 = vmatpush1.msra.mxu0 0.0
  %1167 = vmatprep.subr.mxu0 0.0
  %1168 = vmatpush1.msra.mxu0 0.0
  %1169 = vmatprep.subr.mxu0 0.0
  %1170 = vmatpush1.msra.mxu0 0.0
  %1171 = vmatprep.subr.mxu0 0.0
  %1172 = vmatpush1.msra.mxu0 0.0
  %1173 = vmatprep.mubr.f32.mxu0 0.0
  %1174 = vmatmul.mubr.f32.gmra.mrb[0].mxu0 %v1104
  %v1175 = vpop.f32.mrb[0].mxu0
  %v1176 = vadd.f32 %v1101, %v1175
  %v1177 = vpop.f32.mrb[0].mxu0
  %1178 = vmatprep.mubr.f32.mxu0 0.0
  %1179 = vmatmul.mubr.f32.gmra.mrb[0].mxu0 %v1107
  %v1180 = vpop.f32.mrb[0].mxu0
  %v1181 = vadd.f32 %v1102, %v1180
  %v1182 = vpop.f32.mrb[0].mxu0
  %1183 = vdwg.mxu0
  %1184 = vst.msk [vmem:[%s11] sm:$0xff] %vm44, %v1176
  %1185 = vst.msk [vmem:[%s11 + $0x8] sm:$0xff] %vm44, %v1181
  // Predicated region
  $region46: #{pcnet_forward.2} parent=0 // pred_check
    _
  $region47: #{pcnet_forward.2} parent=0 // pred_check_branch
    %1187 = sbr.rel (0) target = $region49
  $region48: #{pcnet_forward.2} parent=0 // pred_region
    _
  $region49: #{pcnet_forward.2} parent=0 // pred_fallthru
    _
  // Predicated region
  $region50: #{pcnet_forward.2} parent=0 // pred_check
    _
  $region51: #{pcnet_forward.2} parent=0 // pred_check_branch
    %1189 = sbr.rel (0) target = $region53
  $region52: #{pcnet_forward.2} parent=0 // pred_region
    _
  $region53: #{pcnet_forward.2} parent=0 // pred_fallthru
    _

// kernel: pcnet_forward.3
$region0: #{pcnet_forward.3}
  #allocation0 [shape = 'u32[]', space=smem, size = 0x4, offset = 0x4, fixed_abs, tag = 'smem constant byte address 0x4 - core index']
  #allocation1 [shape = 'u32[144,128]{1,0:T(1,128)}', space=vmem, size = 0x12000, scoped, tag = 'internal scratch']
  %s0 = inlined_call_operand.vmem [shape: f32[2,4,4096], index: 0, kind: input, shape index: {}]
  %s1 = inlined_call_operand.vmem [shape: f32[16,4], index: 1, kind: input, shape index: {}]
  %s2 = inlined_call_operand.vmem [shape: f32[16,1], index: 2, kind: input, shape index: {}]
  %s3 = inlined_call_operand.vmem [shape: f32[2,16,4096], index: 3, kind: output, shape index: {}]
  %s4 = sld [smem:[#allocation0]]
  $region64: #{pcnet_forward.3} parent=0
    _
  %s6 = ssub.s32 1, %s4
  %s7 = scalar_select 0, %s6, %s4
  $region1: #{pcnet_forward.3} parent=0
    #allocation2 [shape = 'u8[131072]{0}', space=vmem, size = 0x20000, scoped, tag = 'output window, operand 0']
    loop: start=0, step=1, limit=10
    $region2: #{pcnet_forward.3} parent=1 // loop_pre_header
      _
    $region3: #{pcnet_forward.3} parent=1 // loop_header
      %s9 = sphi 0, %s13
      %p10 = scmp.ge.s32.totalorder %s9, 10
      %s16 = sphi 0, %s28
      %s17 = sphi 0, %s24
      %s18 = sphi 0, %s16
      %s19 = sphi 0, %s17
      %s20 = sphi 0, %s18
      %s21 = sphi 0, %s19
      %s33 = sphi 0, %s35
      %s36 = sphi 0, %s33
      %s37 = sphi 0, %s36
      %s53 = sphi 0, %s37
      %s57 = sphi 0, %s57
      %s59 = sphi 0, %s57
      %s60 = sphi 0, %s59
      %s74 = sphi 0, %s60
      %s78 = sphi 0, %s78
      %s80 = sphi 0, %s78
      %s81 = sphi 0, %s80
      %s95 = sphi 0, %s81
      %s103 = sphi 0, %s105
      %s106 = sphi 0, %s103
      %s107 = sphi 0, %s106
      %s123 = sphi 0, %s107
    $region4: #{pcnet_forward.3} parent=1 // loop_header_branch
      %12 = sbr.rel (%p10) target = $region8
    $region5: #{pcnet_forward.3} parent=1 // loop_body
      %s14 = ssub.s32 %s9, 1
      %s15 = ssub.s32 %s9, 2
      %s22 = sadd.s32 1, %s17
      %p23 = scmp.ge.s32.totalorder %s22, 4
      %s24 = scalar_select %p23, 0, %s22
      %s25 = sadd.s32 1, %s16
      %s26 = scalar_select %p23, %s25, %s16
      %p27 = scmp.ge.s32.totalorder %s26, 2
      %s28 = scalar_select %p27, 0, %s26
      %s29 = ssub.s32 %s16, %s28
      %s30 = ssub.s32 %s17, %s24
      %s31 = sor.u32 %s29, %s30
      %p32 = scmp.eq.s32.totalorder %s31, 0
      %s34 = sadd.s32 %s33, 1
      %s35 = scalar_select %p32, %s33, %s34
      %p38 = pneg %p32
      %p39 = scmp.eq.s32.totalorder %s9, 7
      %p40 = por %p38, %p39
      %p41 = scmp.ne.s32.totalorder %s33, %s36
      %p42 = scmp.eq.s32.totalorder %s9, 0
      %p43 = por %p41, %p42
      %p44 = scmp.ne.s32.totalorder %s33, %s36
      %p45 = scmp.eq.s32.totalorder %s14, 7
      %p46 = por %p44, %p45
      %p47 = scmp.ne.s32.totalorder %s36, %s37
      %p48 = scmp.eq.s32.totalorder %s14, 0
      %p49 = por %p47, %p48
      %p50 = scmp.ne.s32.totalorder %s36, %s37
      %p51 = scmp.eq.s32.totalorder %s15, 7
      %p52 = por %p50, %p51
      %p54 = scmp.ne.s32.totalorder %s37, %s53
      %p55 = scmp.eq.s32.totalorder %s15, 0
      %p56 = por %p54, %p55
      %s58 = sadd.s32 %s57, 1
      %p61 = scmp.eq.s32.totalorder %s9, 7
      %p62 = scmp.ne.s32.totalorder %s57, %s59
      %p63 = scmp.eq.s32.totalorder %s9, 0
      %p64 = por %p62, %p63
      %p65 = scmp.ne.s32.totalorder %s57, %s59
      %p66 = scmp.eq.s32.totalorder %s14, 7
      %p67 = por %p65, %p66
      %p68 = scmp.ne.s32.totalorder %s59, %s60
      %p69 = scmp.eq.s32.totalorder %s14, 0
      %p70 = por %p68, %p69
      %p71 = scmp.ne.s32.totalorder %s59, %s60
      %p72 = scmp.eq.s32.totalorder %s15, 7
      %p73 = por %p71, %p72
      %p75 = scmp.ne.s32.totalorder %s60, %s74
      %p76 = scmp.eq.s32.totalorder %s15, 0
      %p77 = por %p75, %p76
      %s79 = sadd.s32 %s78, 1
      %p82 = scmp.eq.s32.totalorder %s9, 7
      %p83 = scmp.ne.s32.totalorder %s78, %s80
      %p84 = scmp.eq.s32.totalorder %s9, 0
      %p85 = por %p83, %p84
      %p86 = scmp.ne.s32.totalorder %s78, %s80
      %p87 = scmp.eq.s32.totalorder %s14, 7
      %p88 = por %p86, %p87
      %p89 = scmp.ne.s32.totalorder %s80, %s81
      %p90 = scmp.eq.s32.totalorder %s14, 0
      %p91 = por %p89, %p90
      %p92 = scmp.ne.s32.totalorder %s80, %s81
      %p93 = scmp.eq.s32.totalorder %s15, 7
      %p94 = por %p92, %p93
      %p96 = scmp.ne.s32.totalorder %s81, %s95
      %p97 = scmp.eq.s32.totalorder %s15, 0
      %p98 = por %p96, %p97
      %s99 = ssub.s32 %s16, %s28
      %s100 = ssub.s32 %s17, %s24
      %s101 = sor.u32 %s99, %s100
      %p102 = scmp.eq.s32.totalorder %s101, 0
      %s104 = sadd.s32 %s103, 1
      %s105 = scalar_select %p102, %s103, %s104
      %p108 = pneg %p102
      %p109 = scmp.eq.s32.totalorder %s9, 7
      %p110 = por %p108, %p109
      %p111 = scmp.ne.s32.totalorder %s103, %s106
      %p112 = scmp.eq.s32.totalorder %s9, 0
      %p113 = por %p111, %p112
      %p114 = scmp.ne.s32.totalorder %s103, %s106
      %p115 = scmp.eq.s32.totalorder %s14, 7
      %p116 = por %p114, %p115
      %p117 = scmp.ne.s32.totalorder %s106, %s107
      %p118 = scmp.eq.s32.totalorder %s14, 0
      %p119 = por %p117, %p118
      %p120 = scmp.ne.s32.totalorder %s106, %s107
      %p121 = scmp.eq.s32.totalorder %s15, 7
      %p122 = por %p120, %p121
      %p124 = scmp.ne.s32.totalorder %s107, %s123
      %p125 = scmp.eq.s32.totalorder %s15, 0
      %p126 = por %p124, %p125
      %p127 = scmp.le.s32.totalorder 1, %s9
      %p128 = scmp.lt.s32.totalorder %s9, 9
      %p129 = pnand %p127, %p128
      %p130 = pneg %p129
      // Predicated region
      $region9: #{pcnet_forward.3} parent=5 // pred_check
        _
      $region10: #{pcnet_forward.3} parent=5 // pred_check_branch
        %132 = sbr.rel (%p129) target = $region12
      $region11: #{pcnet_forward.3} parent=5 // pred_region
        %s133 = ssub.s32 %s9, 1
        // Predicated region
        $region13: #{pcnet_forward.3} parent=11 // pred_check
          %p134 = pneg %p70
        $region14: #{pcnet_forward.3} parent=11 // pred_check_branch
          %136 = sbr.rel (%p134) target = $region16
        $region15: #{pcnet_forward.3} parent=11 // pred_region
          _
        $region16: #{pcnet_forward.3} parent=11 // pred_fallthru
          _
        // Predicated region
        $region17: #{pcnet_forward.3} parent=11 // pred_check
          %p137 = pneg %p91
        $region18: #{pcnet_forward.3} parent=11 // pred_check_branch
          %139 = sbr.rel (%p137) target = $region20
        $region19: #{pcnet_forward.3} parent=11 // pred_region
          _
        $region20: #{pcnet_forward.3} parent=11 // pred_fallthru
          _
      $region12: #{pcnet_forward.3} parent=5 // pred_fallthru
        _
      %p140 = scmp.lt.s32.totalorder %s9, 8
      // Predicated region
      $region21: #{pcnet_forward.3} parent=5 // pred_check
        %p141 = pneg %p140
      $region22: #{pcnet_forward.3} parent=5 // pred_check_branch
        %143 = sbr.rel (%p141) target = $region24
      $region23: #{pcnet_forward.3} parent=5 // pred_region
        // Predicated region
        $region25: #{pcnet_forward.3} parent=23 // pred_check
          %p144 = pneg %p43
        $region26: #{pcnet_forward.3} parent=23 // pred_check_branch
          %146 = sbr.rel (%p144) target = $region28
        $region27: #{pcnet_forward.3} parent=23 // pred_region
          %s147 = smul.u32 8, %s17
          %p148 = scmp.lt.s32.totalorder %s16, 1
          %s149 = scalar_select %p148, %s16, 1
          %p150 = scmp.lt.s32.totalorder %s147, 31
          %s151 = scalar_select %p150, %s147, 31
          %s152 = smul.addr %s149, 32
          %s153 = sadd.s32 %s151, %s152
          %s154 = smul.addr %s153, 4
          %s155 = scalar_lea.vmem %s0, %s154
          %s156 = smul.u32 8, %s17
        $region28: #{pcnet_forward.3} parent=23 // pred_fallthru
          _
      $region24: #{pcnet_forward.3} parent=5 // pred_fallthru
        _
      %p157 = scmp.le.s32.totalorder 1, %s9
      %p158 = scmp.lt.s32.totalorder %s9, 9
      %p159 = pnand %p157, %p158
      %p160 = pneg %p159
      // Predicated region
      $region29: #{pcnet_forward.3} parent=5 // pred_check
        _
      $region30: #{pcnet_forward.3} parent=5 // pred_check_branch
        %162 = sbr.rel (%p159) target = $region32
      $region31: #{pcnet_forward.3} parent=5 // pred_region
        %s163 = ssub.s32 %s9, 1
        %s164 = smul.u32 8, %s19
        %p165 = scmp.lt.s32.totalorder %s18, 1
        %s166 = scalar_select %p165, %s18, 1
        %p167 = scmp.lt.s32.totalorder %s164, 31
        %s168 = scalar_select %p167, %s164, 31
        %s169 = smul.addr %s166, 32
        %s170 = sadd.s32 %s168, %s169
        %s171 = smul.addr %s170, 4
        %s172 = scalar_lea.vmem %s0, %s171
        %p173 = pneg %p49
        %p174 = pneg %p46
        %p175 = pneg %p70
        %p176 = pneg %p67
        %p177 = pneg %p91
        %p178 = pneg %p88
        %p179 = pneg %p119
        %p180 = pneg %p116
        %s181 = sand.u32 %s106, 1
        %s182 = sand.u32 %s106, 1
        %s183 = smul.addr %s182, 128
        %s184 = scalar_lea.vmem [#allocation2], %s183
        %s185 = smul.u32 8, %s19
        %p186 = scmp.lt.s32.totalorder %s18, 1
        %s187 = scalar_select %p186, %s18, 1
        %p188 = scmp.lt.s32.totalorder %s185, 31
        %s189 = scalar_select %p188, %s185, 31
        %s190 = smul.addr %s187, 32
        %s191 = sadd.s32 %s189, %s190
        %s192 = smul.addr %s191, 4
        %s193 = scalar_lea.vmem %s0, %s192
        %s194 = smul.u32 8, %s19
        %s195 = smul.u32 8, %s19
        %v196 = vld [vmem:[%s1] sm:$0xff]
        %v197 = vld [vmem:[%s1 + $0x8] sm:$0xff]
        %v198 = vld [vmem:[%s193] sm:$0xff]
        %v199 = vld [vmem:[%s193 + $0x8] sm:$0xff]
        %v200 = vld [vmem:[%s193 + $0x10] sm:$0xff]
        %v201 = vld [vmem:[%s193 + $0x18] sm:$0xff]
        %v202 = vld [vmem:[%s2] sm:$0xff]
        %v203 = vld [vmem:[%s2 + $0x8] sm:$0xff]
        %205 = vset.pattern.permute.xlu0 0
        %206 = vperm.xlu0 %205, %v202
        %v207 = vpop.permute.xlu0 %206
        %210 = vset.pattern.permute.xlu0 0
        %211 = vperm.xlu0 %210, %v203
        %v212 = vpop.permute.xlu0 %211
        %v218 = vcombine.high %v198, %v198
        %v219 = vcombine.high %v199, %v199
        %v220 = vcombine.high %v200, %v200
        %v221 = vcombine.high %v201, %v201
        %vm222 = vcmask 31744
        %v224 = vsel %vm222, %v196, 0
        %v227 = vsel %vm222, %v197, 0
        %vm229 = vcmask 1043456
        %v230 = vsel %vm229, %v198, 0
        %v232 = vsel %vm229, %v218, 0
        %v234 = vsel %vm229, %v199, 0
        %v236 = vsel %vm229, %v219, 0
        %v238 = vsel %vm229, %v200, 0
        %v240 = vsel %vm229, %v220, 0
        %v242 = vsel %vm229, %v201, 0
        %v244 = vsel %vm229, %v221, 0
        %246 = vmatprep.subr.mxu0 %v232
        %247 = vmatpush1.msra.mxu0 %v230
        %248 = vmatprep.subr.mxu0 0.0
        %249 = vmatpush1.msra.mxu0 0.0
        %250 = vmatprep.subr.mxu0 0.0
        %251 = vmatpush1.msra.mxu0 0.0
        %252 = vmatprep.subr.mxu0 0.0
        %253 = vmatpush1.msra.mxu0 0.0
        %254 = vmatprep.subr.mxu0 0.0
        %255 = vmatpush1.msra.mxu0 0.0
        %256 = vmatprep.subr.mxu0 0.0
        %257 = vmatpush1.msra.mxu0 0.0
        %258 = vmatprep.subr.mxu0 0.0
        %259 = vmatpush1.msra.mxu0 0.0
        %260 = vmatprep.subr.mxu0 0.0
        %261 = vmatpush1.msra.mxu0 0.0
        %262 = vmatprep.subr.mxu0 0.0
        %263 = vmatpush1.msra.mxu0 0.0
        %264 = vmatprep.subr.mxu0 0.0
        %265 = vmatpush1.msra.mxu0 0.0
        %266 = vmatprep.subr.mxu0 0.0
        %267 = vmatpush1.msra.mxu0 0.0
        %268 = vmatprep.subr.mxu0 0.0
        %269 = vmatpush1.msra.mxu0 0.0
        %270 = vmatprep.subr.mxu0 0.0
        %271 = vmatpush1.msra.mxu0 0.0
        %272 = vmatprep.subr.mxu0 0.0
        %273 = vmatpush1.msra.mxu0 0.0
        %274 = vmatprep.subr.mxu0 0.0
        %275 = vmatpush1.msra.mxu0 0.0
        %276 = vmatprep.subr.mxu0 0.0
        %277 = vmatpush1.msra.mxu0 0.0
        %278 = vmatprep.subr.mxu0 0.0
        %279 = vmatpush1.msra.mxu0 0.0
        %280 = vmatprep.subr.mxu0 0.0
        %281 = vmatpush1.msra.mxu0 0.0
        %282 = vmatprep.subr.mxu0 0.0
        %283 = vmatpush1.msra.mxu0 0.0
        %284 = vmatprep.subr.mxu0 0.0
        %285 = vmatpush1.msra.mxu0 0.0
        %286 = vmatprep.subr.mxu0 0.0
        %287 = vmatpush1.msra.mxu0 0.0
        %288 = vmatprep.subr.mxu0 0.0
        %289 = vmatpush1.msra.mxu0 0.0
        %290 = vmatprep.subr.mxu0 0.0
        %291 = vmatpush1.msra.mxu0 0.0
        %292 = vmatprep.subr.mxu0 0.0
        %293 = vmatpush1.msra.mxu0 0.0
        %294 = vmatprep.subr.mxu0 0.0
        %295 = vmatpush1.msra.mxu0 0.0
        %296 = vmatprep.subr.mxu0 0.0
        %297 = vmatpush1.msra.mxu0 0.0
        %298 = vmatprep.subr.mxu0 0.0
        %299 = vmatpush1.msra.mxu0 0.0
        %300 = vmatprep.subr.mxu0 0.0
        %301 = vmatpush1.msra.mxu0 0.0
        %302 = vmatprep.subr.mxu0 0.0
        %303 = vmatpush1.msra.mxu0 0.0
        %304 = vmatprep.subr.mxu0 0.0
        %305 = vmatpush1.msra.mxu0 0.0
        %306 = vmatprep.subr.mxu0 0.0
        %307 = vmatpush1.msra.mxu0 0.0
        %308 = vmatprep.subr.mxu0 0.0
        %309 = vmatpush1.msra.mxu0 0.0
        %310 = vmatprep.mubr.f32.mxu0 0.0
        %311 = vmatmul.mubr.f32.gmra.mrb[0].mxu0 %v224
        %v312 = vpop.f32.mrb[0].mxu0
        %v313 = vadd.f32 %v207, %v312
        %v314 = vpop.f32.mrb[0].mxu0
        %v315 = vadd.f32 %v207, %v314
        %316 = vmatprep.mubr.f32.mxu0 0.0
        %317 = vmatmul.mubr.f32.gmra.mrb[0].mxu0 %v227
        %v318 = vpop.f32.mrb[0].mxu0
        %v319 = vadd.f32 %v212, %v318
        %v320 = vpop.f32.mrb[0].mxu0
        %v321 = vadd.f32 %v212, %v320
        %322 = vdwg.mxu0
        %323 = vmatprep.subr.mxu0 %v236
        %324 = vmatpush1.msra.mxu0 %v234
        %325 = vmatprep.subr.mxu0 0.0
        %326 = vmatpush1.msra.mxu0 0.0
        %327 = vmatprep.subr.mxu0 0.0
        %328 = vmatpush1.msra.mxu0 0.0
        %329 = vmatprep.subr.mxu0 0.0
        %330 = vmatpush1.msra.mxu0 0.0
        %331 = vmatprep.subr.mxu0 0.0
        %332 = vmatpush1.msra.mxu0 0.0
        %333 = vmatprep.subr.mxu0 0.0
        %334 = vmatpush1.msra.mxu0 0.0
        %335 = vmatprep.subr.mxu0 0.0
        %336 = vmatpush1.msra.mxu0 0.0
        %337 = vmatprep.subr.mxu0 0.0
        %338 = vmatpush1.msra.mxu0 0.0
        %339 = vmatprep.subr.mxu0 0.0
        %340 = vmatpush1.msra.mxu0 0.0
        %341 = vmatprep.subr.mxu0 0.0
        %342 = vmatpush1.msra.mxu0 0.0
        %343 = vmatprep.subr.mxu0 0.0
        %344 = vmatpush1.msra.mxu0 0.0
        %345 = vmatprep.subr.mxu0 0.0
        %346 = vmatpush1.msra.mxu0 0.0
        %347 = vmatprep.subr.mxu0 0.0
        %348 = vmatpush1.msra.mxu0 0.0
        %349 = vmatprep.subr.mxu0 0.0
        %350 = vmatpush1.msra.mxu0 0.0
        %351 = vmatprep.subr.mxu0 0.0
        %352 = vmatpush1.msra.mxu0 0.0
        %353 = vmatprep.subr.mxu0 0.0
        %354 = vmatpush1.msra.mxu0 0.0
        %355 = vmatprep.subr.mxu0 0.0
        %356 = vmatpush1.msra.mxu0 0.0
        %357 = vmatprep.subr.mxu0 0.0
        %358 = vmatpush1.msra.mxu0 0.0
        %359 = vmatprep.subr.mxu0 0.0
        %360 = vmatpush1.msra.mxu0 0.0
        %361 = vmatprep.subr.mxu0 0.0
        %362 = vmatpush1.msra.mxu0 0.0
        %363 = vmatprep.subr.mxu0 0.0
        %364 = vmatpush1.msra.mxu0 0.0
        %365 = vmatprep.subr.mxu0 0.0
        %366 = vmatpush1.msra.mxu0 0.0
        %367 = vmatprep.subr.mxu0 0.0
        %368 = vmatpush1.msra.mxu0 0.0
        %369 = vmatprep.subr.mxu0 0.0
        %370 = vmatpush1.msra.mxu0 0.0
        %371 = vmatprep.subr.mxu0 0.0
        %372 = vmatpush1.msra.mxu0 0.0
        %373 = vmatprep.subr.mxu0 0.0
        %374 = vmatpush1.msra.mxu0 0.0
        %375 = vmatprep.subr.mxu0 0.0
        %376 = vmatpush1.msra.mxu0 0.0
        %377 = vmatprep.subr.mxu0 0.0
        %378 = vmatpush1.msra.mxu0 0.0
        %379 = vmatprep.subr.mxu0 0.0
        %380 = vmatpush1.msra.mxu0 0.0
        %381 = vmatprep.subr.mxu0 0.0
        %382 = vmatpush1.msra.mxu0 0.0
        %383 = vmatprep.subr.mxu0 0.0
        %384 = vmatpush1.msra.mxu0 0.0
        %385 = vmatprep.subr.mxu0 0.0
        %386 = vmatpush1.msra.mxu0 0.0
        %387 = vmatprep.mubr.f32.mxu0 0.0
        %388 = vmatmul.mubr.f32.gmra.mrb[0].mxu0 %v224
        %v389 = vpop.f32.mrb[0].mxu0
        %v390 = vadd.f32 %v207, %v389
        %v391 = vpop.f32.mrb[0].mxu0
        %v392 = vadd.f32 %v207, %v391
        %393 = vmatprep.mubr.f32.mxu0 0.0
        %394 = vmatmul.mubr.f32.gmra.mrb[0].mxu0 %v227
        %v395 = vpop.f32.mrb[0].mxu0
        %v396 = vadd.f32 %v212, %v395
        %v397 = vpop.f32.mrb[0].mxu0
        %v398 = vadd.f32 %v212, %v397
        %399 = vdwg.mxu0
        %400 = vmatprep.subr.mxu0 %v240
        %401 = vmatpush1.msra.mxu0 %v238
        %402 = vmatprep.subr.mxu0 0.0
        %403 = vmatpush1.msra.mxu0 0.0
        %404 = vmatprep.subr.mxu0 0.0
        %405 = vmatpush1.msra.mxu0 0.0
        %406 = vmatprep.subr.mxu0 0.0
        %407 = vmatpush1.msra.mxu0 0.0
        %408 = vmatprep.subr.mxu0 0.0
        %409 = vmatpush1.msra.mxu0 0.0
        %410 = vmatprep.subr.mxu0 0.0
        %411 = vmatpush1.msra.mxu0 0.0
        %412 = vmatprep.subr.mxu0 0.0
        %413 = vmatpush1.msra.mxu0 0.0
        %414 = vmatprep.subr.mxu0 0.0
        %415 = vmatpush1.msra.mxu0 0.0
        %416 = vmatprep.subr.mxu0 0.0
        %417 = vmatpush1.msra.mxu0 0.0
        %418 = vmatprep.subr.mxu0 0.0
        %419 = vmatpush1.msra.mxu0 0.0
        %420 = vmatprep.subr.mxu0 0.0
        %421 = vmatpush1.msra.mxu0 0.0
        %422 = vmatprep.subr.mxu0 0.0
        %423 = vmatpush1.msra.mxu0 0.0
        %424 = vmatprep.subr.mxu0 0.0
        %425 = vmatpush1.msra.mxu0 0.0
        %426 = vmatprep.subr.mxu0 0.0
        %427 = vmatpush1.msra.mxu0 0.0
        %428 = vmatprep.subr.mxu0 0.0
        %429 = vmatpush1.msra.mxu0 0.0
        %430 = vmatprep.subr.mxu0 0.0
        %431 = vmatpush1.msra.mxu0 0.0
        %432 = vmatprep.subr.mxu0 0.0
        %433 = vmatpush1.msra.mxu0 0.0
        %434 = vmatprep.subr.mxu0 0.0
        %435 = vmatpush1.msra.mxu0 0.0
        %436 = vmatprep.subr.mxu0 0.0
        %437 = vmatpush1.msra.mxu0 0.0
        %438 = vmatprep.subr.mxu0 0.0
        %439 = vmatpush1.msra.mxu0 0.0
        %440 = vmatprep.subr.mxu0 0.0
        %441 = vmatpush1.msra.mxu0 0.0
        %442 = vmatprep.subr.mxu0 0.0
        %443 = vmatpush1.msra.mxu0 0.0
        %444 = vmatprep.subr.mxu0 0.0
        %445 = vmatpush1.msra.mxu0 0.0
        %446 = vmatprep.subr.mxu0 0.0
        %447 = vmatpush1.msra.mxu0 0.0
        %448 = vmatprep.subr.mxu0 0.0
        %449 = vmatpush1.msra.mxu0 0.0
        %450 = vmatprep.subr.mxu0 0.0
        %451 = vmatpush1.msra.mxu0 0.0
        %452 = vmatprep.subr.mxu0 0.0
        %453 = vmatpush1.msra.mxu0 0.0
        %454 = vmatprep.subr.mxu0 0.0
        %455 = vmatpush1.msra.mxu0 0.0
        %456 = vmatprep.subr.mxu0 0.0
        %457 = vmatpush1.msra.mxu0 0.0
        %458 = vmatprep.subr.mxu0 0.0
        %459 = vmatpush1.msra.mxu0 0.0
        %460 = vmatprep.subr.mxu0 0.0
        %461 = vmatpush1.msra.mxu0 0.0
        %462 = vmatprep.subr.mxu0 0.0
        %463 = vmatpush1.msra.mxu0 0.0
        %464 = vmatprep.mubr.f32.mxu0 0.0
        %465 = vmatmul.mubr.f32.gmra.mrb[0].mxu0 %v224
        %v466 = vpop.f32.mrb[0].mxu0
        %v467 = vadd.f32 %v207, %v466
        %v468 = vpop.f32.mrb[0].mxu0
        %v469 = vadd.f32 %v207, %v468
        %470 = vmatprep.mubr.f32.mxu0 0.0
        %471 = vmatmul.mubr.f32.gmra.mrb[0].mxu0 %v227
        %v472 = vpop.f32.mrb[0].mxu0
        %v473 = vadd.f32 %v212, %v472
        %v474 = vpop.f32.mrb[0].mxu0
        %v475 = vadd.f32 %v212, %v474
        %476 = vdwg.mxu0
        %477 = vmatprep.subr.mxu0 %v244
        %478 = vmatpush1.msra.mxu0 %v242
        %479 = vmatprep.subr.mxu0 0.0
        %480 = vmatpush1.msra.mxu0 0.0
        %481 = vmatprep.subr.mxu0 0.0
        %482 = vmatpush1.msra.mxu0 0.0
        %483 = vmatprep.subr.mxu0 0.0
        %484 = vmatpush1.msra.mxu0 0.0
        %485 = vmatprep.subr.mxu0 0.0
        %486 = vmatpush1.msra.mxu0 0.0
        %487 = vmatprep.subr.mxu0 0.0
        %488 = vmatpush1.msra.mxu0 0.0
        %489 = vmatprep.subr.mxu0 0.0
        %490 = vmatpush1.msra.mxu0 0.0
        %491 = vmatprep.subr.mxu0 0.0
        %492 = vmatpush1.msra.mxu0 0.0
        %493 = vmatprep.subr.mxu0 0.0
        %494 = vmatpush1.msra.mxu0 0.0
        %495 = vmatprep.subr.mxu0 0.0
        %496 = vmatpush1.msra.mxu0 0.0
        %497 = vmatprep.subr.mxu0 0.0
        %498 = vmatpush1.msra.mxu0 0.0
        %499 = vmatprep.subr.mxu0 0.0
        %500 = vmatpush1.msra.mxu0 0.0
        %501 = vmatprep.subr.mxu0 0.0
        %502 = vmatpush1.msra.mxu0 0.0
        %503 = vmatprep.subr.mxu0 0.0
        %504 = vmatpush1.msra.mxu0 0.0
        %505 = vmatprep.subr.mxu0 0.0
        %506 = vmatpush1.msra.mxu0 0.0
        %507 = vmatprep.subr.mxu0 0.0
        %508 = vmatpush1.msra.mxu0 0.0
        %509 = vmatprep.subr.mxu0 0.0
        %510 = vmatpush1.msra.mxu0 0.0
        %511 = vmatprep.subr.mxu0 0.0
        %512 = vmatpush1.msra.mxu0 0.0
        %513 = vmatprep.subr.mxu0 0.0
        %514 = vmatpush1.msra.mxu0 0.0
        %515 = vmatprep.subr.mxu0 0.0
        %516 = vmatpush1.msra.mxu0 0.0
        %517 = vmatprep.subr.mxu0 0.0
        %518 = vmatpush1.msra.mxu0 0.0
        %519 = vmatprep.subr.mxu0 0.0
        %520 = vmatpush1.msra.mxu0 0.0
        %521 = vmatprep.subr.mxu0 0.0
        %522 = vmatpush1.msra.mxu0 0.0
        %523 = vmatprep.subr.mxu0 0.0
        %524 = vmatpush1.msra.mxu0 0.0
        %525 = vmatprep.subr.mxu0 0.0
        %526 = vmatpush1.msra.mxu0 0.0
        %527 = vmatprep.subr.mxu0 0.0
        %528 = vmatpush1.msra.mxu0 0.0
        %529 = vmatprep.subr.mxu0 0.0
        %530 = vmatpush1.msra.mxu0 0.0
        %531 = vmatprep.subr.mxu0 0.0
        %532 = vmatpush1.msra.mxu0 0.0
        %533 = vmatprep.subr.mxu0 0.0
        %534 = vmatpush1.msra.mxu0 0.0
        %535 = vmatprep.subr.mxu0 0.0
        %536 = vmatpush1.msra.mxu0 0.0
        %537 = vmatprep.subr.mxu0 0.0
        %538 = vmatpush1.msra.mxu0 0.0
        %539 = vmatprep.subr.mxu0 0.0
        %540 = vmatpush1.msra.mxu0 0.0
        %541 = vmatprep.mubr.f32.mxu0 0.0
        %542 = vmatmul.mubr.f32.gmra.mrb[0].mxu0 %v224
        %v543 = vpop.f32.mrb[0].mxu0
        %v544 = vadd.f32 %v207, %v543
        %v545 = vpop.f32.mrb[0].mxu0
        %v546 = vadd.f32 %v207, %v545
        %547 = vmatprep.mubr.f32.mxu0 0.0
        %548 = vmatmul.mubr.f32.gmra.mrb[0].mxu0 %v227
        %v549 = vpop.f32.mrb[0].mxu0
        %v550 = vadd.f32 %v212, %v549
        %v551 = vpop.f32.mrb[0].mxu0
        %v552 = vadd.f32 %v212, %v551
        %553 = vdwg.mxu0
        %554 = vst [vmem:[%s184] sm:$0xff] %v313
        %555 = vst [vmem:[%s184 + $0x8] sm:$0xff] %v315
        %556 = vst [vmem:[%s184 + $0x10] sm:$0xff] %v390
        %557 = vst [vmem:[%s184 + $0x18] sm:$0xff] %v392
        %558 = vst [vmem:[%s184 + $0x20] sm:$0xff] %v467
        %559 = vst [vmem:[%s184 + $0x28] sm:$0xff] %v469
        %560 = vst [vmem:[%s184 + $0x30] sm:$0xff] %v544
        %561 = vst [vmem:[%s184 + $0x38] sm:$0xff] %v546
        %562 = vst [vmem:[%s184 + $0x40] sm:$0xff] %v319
        %563 = vst [vmem:[%s184 + $0x48] sm:$0xff] %v321
        %564 = vst [vmem:[%s184 + $0x50] sm:$0xff] %v396
        %565 = vst [vmem:[%s184 + $0x58] sm:$0xff] %v398
        %566 = vst [vmem:[%s184 + $0x60] sm:$0xff] %v473
        %567 = vst [vmem:[%s184 + $0x68] sm:$0xff] %v475
        %568 = vst [vmem:[%s184 + $0x70] sm:$0xff] %v550
        %569 = vst [vmem:[%s184 + $0x78] sm:$0xff] %v552
        %s570 = sand.u32 %s106, 1
        %s571 = sand.u32 %s106, 1
        %s572 = smul.addr %s571, 128
        %s573 = scalar_lea.vmem [#allocation2], %s572
        // Predicated region
        $region33: #{pcnet_forward.3} parent=31 // pred_check
          %p574 = pneg %p116
        $region34: #{pcnet_forward.3} parent=31 // pred_check_branch
          %576 = sbr.rel (%p574) target = $region36
        $region35: #{pcnet_forward.3} parent=31 // pred_region
          %s577 = smul.u32 8, %s19
          %s578 = smul.addr %s18, 64
          %s579 = sadd.s32 %s577, %s578
          %s580 = smul.addr %s579, 8
          %s581 = scalar_lea.vmem %s3, %s580
          // Predicated region
          $region37: #{pcnet_forward.3} parent=35 // pred_check
            _
          $region38: #{pcnet_forward.3} parent=35 // pred_check_branch
            %583 = sbr.rel (0) target = $region40
          $region39: #{pcnet_forward.3} parent=35 // pred_region
            // Predicated region
            $region41: #{pcnet_forward.3} parent=39 // pred_check
              _
            $region42: #{pcnet_forward.3} parent=39 // pred_check_branch
              %585 = sbr.rel (0) target = $region44
            $region43: #{pcnet_forward.3} parent=39 // pred_region
              loop: start=0, step=1, limit=1
              $region45: #{pcnet_forward.3} parent=43 // loop_pre_header
                _
              $region46: #{pcnet_forward.3} parent=43 // loop_header
                %s587 = sphi 0, %s591
                %p588 = scmp.ge.s32.totalorder %s587, 1
                %s592 = sphi %s573, %s573
                %s593 = sphi %s581, %s581
              $region47: #{pcnet_forward.3} parent=43 // loop_header_branch
                %590 = sbr.rel (%p588) target = $region51
              $region48: #{pcnet_forward.3} parent=43 // loop_body
                %v594 = vld [vmem:[%s592] sm:$0xff]
                %595 = vst [vmem:[%s593] sm:$0xff] %v594
                %v596 = vld [vmem:[%s592 + $0x8] sm:$0xff]
                %597 = vst [vmem:[%s593 + $0x8] sm:$0xff] %v596
                %v598 = vld [vmem:[%s592 + $0x10] sm:$0xff]
                %599 = vst [vmem:[%s593 + $0x10] sm:$0xff] %v598
                %v600 = vld [vmem:[%s592 + $0x18] sm:$0xff]
                %601 = vst [vmem:[%s593 + $0x18] sm:$0xff] %v600
                %v602 = vld [vmem:[%s592 + $0x20] sm:$0xff]
                %603 = vst [vmem:[%s593 + $0x20] sm:$0xff] %v602
                %v604 = vld [vmem:[%s592 + $0x28] sm:$0xff]
                %605 = vst [vmem:[%s593 + $0x28] sm:$0xff] %v604
                %v606 = vld [vmem:[%s592 + $0x30] sm:$0xff]
                %607 = vst [vmem:[%s593 + $0x30] sm:$0xff] %v606
                %v608 = vld [vmem:[%s592 + $0x38] sm:$0xff]
                %609 = vst [vmem:[%s593 + $0x38] sm:$0xff] %v608
                %v610 = vld [vmem:[%s592 + $0x40] sm:$0xff]
                %611 = vst [vmem:[%s593 + $0x100] sm:$0xff] %v610
                %v612 = vld [vmem:[%s592 + $0x48] sm:$0xff]
                %613 = vst [vmem:[%s593 + $0x108] sm:$0xff] %v612
                %v614 = vld [vmem:[%s592 + $0x50] sm:$0xff]
                %615 = vst [vmem:[%s593 + $0x110] sm:$0xff] %v614
                %v616 = vld [vmem:[%s592 + $0x58] sm:$0xff]
                %617 = vst [vmem:[%s593 + $0x118] sm:$0xff] %v616
                %v618 = vld [vmem:[%s592 + $0x60] sm:$0xff]
                %619 = vst [vmem:[%s593 + $0x120] sm:$0xff] %v618
                %v620 = vld [vmem:[%s592 + $0x68] sm:$0xff]
                %621 = vst [vmem:[%s593 + $0x128] sm:$0xff] %v620
                %v622 = vld [vmem:[%s592 + $0x70] sm:$0xff]
                %623 = vst [vmem:[%s593 + $0x130] sm:$0xff] %v622
                %v624 = vld [vmem:[%s592 + $0x78] sm:$0xff]
                %625 = vst [vmem:[%s593 + $0x138] sm:$0xff] %v624
              $region49: #{pcnet_forward.3} parent=43 // loop_footer
                %s591 = sadd.s32 1, %s587
              $region50: #{pcnet_forward.3} parent=43 // loop_footer_branch
                %586 = sbr.rel target = $region46
              $region51: #{pcnet_forward.3} parent=43 // loop_exit
                _
            $region44: #{pcnet_forward.3} parent=39 // pred_fallthru
              _
            // Predicated region
            $region52: #{pcnet_forward.3} parent=39 // pred_check
              _
            $region53: #{pcnet_forward.3} parent=39 // pred_check_branch
              %627 = sbr.rel target = $region55
            $region54: #{pcnet_forward.3} parent=39 // pred_region
              _
            $region55: #{pcnet_forward.3} parent=39 // pred_fallthru
              _
          $region40: #{pcnet_forward.3} parent=35 // pred_fallthru
            _
          %628 = vnop
        $region36: #{pcnet_forward.3} parent=31 // pred_fallthru
          _
      $region32: #{pcnet_forward.3} parent=5 // pred_fallthru
        _
      %p629 = scmp.le.s32.totalorder 2, %s9
      // Predicated region
      $region56: #{pcnet_forward.3} parent=5 // pred_check
        %p630 = pneg %p629
      $region57: #{pcnet_forward.3} parent=5 // pred_check_branch
        %632 = sbr.rel (%p630) target = $region59
      $region58: #{pcnet_forward.3} parent=5 // pred_region
        %s633 = ssub.s32 %s9, 2
        // Predicated region
        $region60: #{pcnet_forward.3} parent=58 // pred_check
          %p634 = pneg %p122
        $region61: #{pcnet_forward.3} parent=58 // pred_check_branch
          %636 = sbr.rel (%p634) target = $region63
        $region62: #{pcnet_forward.3} parent=58 // pred_region
          %s637 = sand.u32 %s107, 1
          %s638 = sand.u32 %s107, 1
          %s639 = smul.addr %s638, 128
          %s640 = scalar_lea.vmem [#allocation2], %s639
        $region63: #{pcnet_forward.3} parent=58 // pred_fallthru
          _
      $region59: #{pcnet_forward.3} parent=5 // pred_fallthru
        _
    $region6: #{pcnet_forward.3} parent=1 // loop_footer
      %s13 = sadd.s32 1, %s9
    $region7: #{pcnet_forward.3} parent=1 // loop_footer_branch
      %8 = sbr.rel target = $region3
    $region8: #{pcnet_forward.3} parent=1 // loop_exit
      _

</llo_original>
